<compile_context>
chip_gen: v6e
topology: v6e:2x2x1
jax: 0.10.0
libtpu: 0.0.40
codegen_flags: <defaults>
</compile_context>

<pallas_src>
import jax
import jax.numpy as jnp
from jax.experimental import pallas as pl
from jax.experimental.pallas import tpu as pltpu

# ---------------------------------------------------------------------------
# Small synthetic configs (same structure as the PyTorch CONFIG, small sizes).
# ---------------------------------------------------------------------------
CFG_RNA = {'in_features': 64, 'layers': [64, 32, 16, 2],
           'minibatch_size': 8, 'use_batchnorm': True, 'use_tanh': False}
CFG_ATAC = {'in_features': 48, 'layers': [64, 32, 16, 2],
            'minibatch_size': 8, 'use_batchnorm': True, 'use_tanh': False}

assert CFG_RNA['use_batchnorm'] == CFG_ATAC['use_batchnorm']
assert CFG_RNA['use_tanh'] == CFG_ATAC['use_tanh']

BN_EPS = 1e-5
LRELU_SLOPE = 0.2          # nn.LeakyReLU(negative_slope=0.2) in the reference
LANE = 128                 # pad every feature dim to the lane width
N_LAYERS = 8               # 4 encoder + 4 decoder layers per modality path
BN_LAYERS = (0, 1, 2, 4, 5, 6)   # hidden layers: BN (if enabled) + LeakyReLU
LATENT_LAYER = 3           # encoder output (latent); layer 7 = reconstruction
USE_BN = CFG_RNA['use_batchnorm']
USE_TANH = CFG_RNA['use_tanh']
D_RNA = CFG_RNA['in_features']
D_ATAC = CFG_ATAC['in_features']


def _modality_dim_semantics():
    """CORE_PARALLEL on v7x (2 TCs/chip) so each path runs on its own core;
    plain "parallel" on single-TC chips (v5e/v6e)."""
    try:
        kind = jax.devices()[0].device_kind.lower()
    except Exception:
        kind = ""
    if ("v7" in kind or "7x" in kind) and hasattr(pltpu, "CORE_PARALLEL"):
        return (pltpu.CORE_PARALLEL,)
    return ("parallel",)


DIM_SEMANTICS = _modality_dim_semantics()


# ---------------------------------------------------------------------------
# Fused whole-path kernel: 8 x (Linear [+BN] [+LeakyReLU]) chained in VMEM.
#   rna_ref:    (B, D_RNA)           raw RNA input (no host-side padding)
#   atac_ref:   (B, D_ATAC)          raw ATAC input
#   w_ref:      (8, 128, 128) bf16   padded weights of this path, layer-major
#   aux_ref:    (8, 8, 128)   f32    row 0 = bias, row 1 = gamma, row 2 = beta
#   recon_ref:  (B, 128)             padded reconstruction
#   latent_ref: (B, 128)             padded latent (first layers[3] lanes valid)
#   h_scratch:  (B, 128)             VMEM scratch used to lane-pad the input
# ---------------------------------------------------------------------------
def _ae_path_kernel(rna_ref, atac_ref, w_ref, aux_ref, recon_ref, latent_ref,
                    h_scratch):
    m = pl.program_id(0)                      # 0 = RNA path, 1 = ATAC path

    # Lane-pad this path's input into VMEM scratch (replaces host-side pad/stack).
    h_scratch[...] = jnp.zeros_like(h_scratch)

    @pl.when(m == 0)
    def _():
        h_scratch[:, :D_RNA] = rna_ref[...].astype(jnp.float32)

    @pl.when(m == 1)
    def _():
        h_scratch[:, :D_ATAC] = atac_ref[...].astype(jnp.float32)

    h = h_scratch[...]
    inv_b = 1.0 / float(h.shape[0])           # static; BN stats over the whole batch

    for l in range(N_LAYERS):                 # static unroll: 8 tiny MXU matmuls
        aux = aux_ref[l]                      # (8, 128): rows bias / gamma / beta
        # bf16 x bf16 operands, f32 accumulation on the MXU.
        y = jnp.dot(h.astype(jnp.bfloat16), w_ref[l],
                    preferred_element_type=jnp.float32)
        bn_here = (l in BN_LAYERS) and USE_BN
        if not bn_here:
            # On BN layers the per-column bias is cancelled by the mean subtraction,
            # so it is only added on non-BN layers (latent / recon, or all if no BN).
            y = y + aux[0:1, :]
        if l in BN_LAYERS:
            if USE_BN:
                # Single-pass batch statistics + folded affine transform.
                s1 = jnp.sum(y, axis=0, keepdims=True)
                s2 = jnp.sum(y * y, axis=0, keepdims=True)
                mean = s1 * inv_b
                var = s2 * inv_b - mean * mean
                scale = aux[1:2, :] * jax.lax.rsqrt(var + BN_EPS)
                shift = aux[2:3, :] - mean * scale
                y = y * scale + shift
            y = jnp.where(y >= 0, y, LRELU_SLOPE * y)      # LeakyReLU(0.2)
        if l == LATENT_LAYER:
            if USE_TANH:
                y = jnp.tanh(y)
            latent_ref[...] = y
        h = y
    recon_ref[...] = h


# ---------------------------------------------------------------------------
# Parameter init (deterministic, PyTorch-Linear-like uniform init), unpacked form.
# ---------------------------------------------------------------------------
def _init_linear(key, fan_in, fan_out):
    kw, kb = jax.random.split(key)
    bound = 1.0 / jnp.sqrt(jnp.float32(fan_in))
    w = jax.random.uniform(kw, (fan_in, fan_out), jnp.float32, -bound, bound)
    b = jax.random.uniform(kb, (1, fan_out), jnp.float32, -bound, bound)
    return {'w': w, 'b': b}


def _init_bn(dim):
    return {'gamma': jnp.ones((1, dim), jnp.float32),
            'beta': jnp.zeros((1, dim), jnp.float32)}


def init_encoder(key, cfg):
    dims = [cfg['in_features']] + cfg['layers']
    keys = jax.random.split(key, 4)
    params = {'linears': [_init_linear(keys[i], dims[i], dims[i + 1]) for i in range(4)]}
    if cfg['use_batchnorm']:
        params['bns'] = [_init_bn(dims[i + 1]) for i in range(3)]
    return params


def init_decoder(key, cfg):
    dims = [cfg['layers'][3], cfg['layers'][2], cfg['layers'][1],
            cfg['layers'][0], cfg['in_features']]
    keys = jax.random.split(key, 4)
    params = {'linears': [_init_linear(keys[i], dims[i], dims[i + 1]) for i in range(4)]}
    if cfg['use_batchnorm']:
        params['bns'] = [_init_bn(dims[i + 1]) for i in range(3)]
    return params


def init_ae_unpaired(key, cfg_rna, cfg_atac):
    k1, k2, k3, k4 = jax.random.split(key, 4)
    return {
        'atac_encoder': init_encoder(k1, cfg_atac),
        'rna_encoder': init_encoder(k2, cfg_rna),
        'atac_decoder': init_decoder(k3, cfg_atac),
        'rna_decoder': init_decoder(k4, cfg_rna),
    }


# ---------------------------------------------------------------------------
# Pack params into lane-padded, layer-stacked arrays (done once at init time).
#   W:   (2, 8, 128, 128) bfloat16   zero-padded weight stack
#   aux: (2, 8, 8, 128)   float32    row 0 bias, row 1 gamma, row 2 beta, rest 0
# ---------------------------------------------------------------------------
def _pack_path(enc, dec, cfg):
    lins = enc['linears'] + dec['linears']         # layer order: enc0..3, dec0..3
    bn_map = {}
    if cfg['use_batchnorm']:
        for i in range(3):
            bn_map[i] = enc['bns'][i]
            bn_map[4 + i] = dec['bns'][i]
    W = jnp.zeros((N_LAYERS, LANE, LANE), jnp.float32)
    AUX = jnp.zeros((N_LAYERS, 8, LANE), jnp.float32)
    AUX = AUX.at[:, 1, :].set(1.0)                 # gamma default (padded lanes inert)
    for l, lin in enumerate(lins):
        din, dout = lin['w'].shape
        W = W.at[l, :din, :dout].set(lin['w'])
        AUX = AUX.at[l, 0, :dout].set(lin['b'][0])
        if l in bn_map:
            AUX = AUX.at[l, 1, :dout].set(bn_map[l]['gamma'][0])
            AUX = AUX.at[l, 2, :dout].set(bn_map[l]['beta'][0])
    return W.astype(jnp.bfloat16), AUX


def pack_params(raw):
    # path index 0 = RNA, 1 = ATAC
    w_r, aux_r = _pack_path(raw['rna_encoder'], raw['rna_decoder'], CFG_RNA)
    w_a, aux_a = _pack_path(raw['atac_encoder'], raw['atac_decoder'], CFG_ATAC)
    return {'W': jnp.stack([w_r, w_a]),            # (2, 8, 128, 128) bf16
            'aux': jnp.stack([aux_r, aux_a])}      # (2, 8, 8, 128)   f32


# ---------------------------------------------------------------------------
# Forward: one pallas_call for the whole model, grid=(2,) over modality paths.
# NOTE: the batch axis is a single block on purpose -- BatchNorm statistics are
# taken over the whole batch; never tile B across the grid.
# ---------------------------------------------------------------------------
@jax.jit
def ae_unpaired_forward(packed, atac, rna):
    B = rna.shape[0]
    assert atac.shape[0] == B and B % 8 == 0, "batch must be a multiple of 8"

    full_map = lambda m: (0, 0)
    par_map = lambda m: (m, 0, 0, 0)
    act_map = lambda m: (m, 0, 0)
    recon, latent = pl.pallas_call(
        _ae_path_kernel,
        out_shape=(jax.ShapeDtypeStruct((2, B, LANE), jnp.float32),
                   jax.ShapeDtypeStruct((2, B, LANE), jnp.float32)),
        grid=(2,),
        in_specs=[pl.BlockSpec((B, D_RNA), full_map),
                  pl.BlockSpec((B, D_ATAC), full_map),
                  pl.BlockSpec((None, N_LAYERS, LANE, LANE), par_map),
                  pl.BlockSpec((None, N_LAYERS, 8, LANE), par_map)],
        out_specs=(pl.BlockSpec((None, B, LANE), act_map),
                   pl.BlockSpec((None, B, LANE), act_map)),
        scratch_shapes=[pltpu.VMEM((B, LANE), jnp.float32)],
        compiler_params=pltpu.CompilerParams(
            dimension_semantics=DIM_SEMANTICS),    # RNA / ATAC paths are independent
    )(rna.astype(jnp.float32), atac.astype(jnp.float32),
      packed['W'], packed['aux'])

    recon_rna = recon[0, :, :CFG_RNA['in_features']]
    recon_atac = recon[1, :, :CFG_ATAC['in_features']]
    latent_rna = latent[0, :, :CFG_RNA['layers'][3]]
    latent_atac = latent[1, :, :CFG_ATAC['layers'][3]]
    return recon_rna, recon_atac, latent_rna, latent_atac


# ---------------------------------------------------------------------------
# Pure-JAX reference (matches the PyTorch forward) for a correctness check.
# ---------------------------------------------------------------------------
def _ref_mlp4(x, p, cfg):
    use_bn = cfg['use_batchnorm']
    for i in range(3):
        lin = p['linears'][i]
        y = jnp.dot(x, lin['w'], precision=jax.lax.Precision.HIGHEST) + lin['b']
        if use_bn:
            bn = p['bns'][i]
            mean = jnp.mean(y, axis=0, keepdims=True)
            var = jnp.mean((y - mean) ** 2, axis=0, keepdims=True)
            y = (y - mean) / jnp.sqrt(var + BN_EPS)
            y = y * bn['gamma'] + bn['beta']
        x = jnp.where(y >= 0, y, LRELU_SLOPE * y)
    lin = p['linears'][3]
    return jnp.dot(x, lin['w'], precision=jax.lax.Precision.HIGHEST) + lin['b']


def reference_forward(raw, atac, rna):
    latent_atac = _ref_mlp4(atac, raw['atac_encoder'], CFG_ATAC)
    latent_rna = _ref_mlp4(rna, raw['rna_encoder'], CFG_RNA)
    if CFG_RNA['use_tanh']:
        latent_rna = jnp.tanh(latent_rna)
    if CFG_ATAC['use_tanh']:
        latent_atac = jnp.tanh(latent_atac)
    recon_rna = _ref_mlp4(latent_rna, raw['rna_decoder'], CFG_RNA)
    recon_atac = _ref_mlp4(latent_atac, raw['atac_decoder'], CFG_ATAC)
    return recon_rna, recon_atac, latent_rna, latent_atac


# ---------------------------------------------------------------------------
if __name__ == "__main__":
    key = jax.random.PRNGKey(0)
    kp, ka, kr = jax.random.split(key, 3)

    batch = 8
    raw_params = init_ae_unpaired(kp, CFG_RNA, CFG_ATAC)
    packed = pack_params(raw_params)
    atac = jax.random.normal(ka, (batch, CFG_ATAC['in_features']), jnp.float32)
    rna = jax.random.normal(kr, (batch, CFG_RNA['in_features']), jnp.float32)

    outs = ae_unpaired_forward(packed, atac, rna)
    jax.block_until_ready(outs)
    recon_rna, recon_atac, latent_rna, latent_atac = outs

    assert recon_rna.shape == (batch, CFG_RNA['in_features'])
    assert recon_atac.shape == (batch, CFG_ATAC['in_features'])
    assert latent_rna.shape == (batch, CFG_RNA['layers'][3])
    assert latent_atac.shape == (batch, CFG_ATAC['layers'][3])

    # Numerical check against the pure-JAX (f32, HIGHEST precision) reference.
    # Tolerance is 3e-2: the kernel uses bf16 MXU operands (f32 accumulation)
    # across an 8-layer chain, which accumulates ~1-2% relative rounding.
    refs = reference_forward(raw_params, atac, rna)
    for name, got, want in zip(
            ("recon_rna", "recon_atac", "latent_rna", "latent_atac"), outs, refs):
        err = float(jnp.max(jnp.abs(got - want)))
        assert jnp.allclose(got, want, rtol=3e-2, atol=3e-2), (name, err)

    print("KERNEL_OK")
</pallas_src>

<mosaic_0001>
module attributes {stable_mosaic.version = 11 : i64} {
  func.func @_ae_path_kernel(%arg0: i32, %arg1: memref<8x64xf32, #tpu.memory_space<vmem>>, %arg2: memref<8x48xf32, #tpu.memory_space<vmem>>, %arg3: memref<1x8x128x128xbf16, #tpu.memory_space<vmem>>, %arg4: memref<1x8x8x128xf32, #tpu.memory_space<vmem>>, %arg5: memref<1x8x128xf32, #tpu.memory_space<vmem>>, %arg6: memref<1x8x128xf32, #tpu.memory_space<vmem>>, %arg7: memref<8x128xf32, #tpu.memory_space<vmem>>) attributes {dimension_semantics = [#tpu.dimension_semantics<parallel>], iteration_bounds = array<i64: 2>, scalar_prefetch = 0 : i64, scratch_operands = 1 : i64, tpu.core_type = #tpu.core_type<tc>, window_params = [{pipeline_mode = #tpu.pipeline_mode<synchronous>, transform_indices = @transform_0, window_bounds = array<i64: 8, 64>}, {pipeline_mode = #tpu.pipeline_mode<synchronous>, transform_indices = @transform_1, window_bounds = array<i64: 8, 48>}, {transform_indices = @transform_2, window_bounds = array<i64: 1, 8, 128, 128>}, {transform_indices = @transform_3, window_bounds = array<i64: 1, 8, 8, 128>}, {transform_indices = @transform_4, window_bounds = array<i64: 1, 8, 128>}, {transform_indices = @transform_5, window_bounds = array<i64: 1, 8, 128>}]} {
    %cst = arith.constant 0.000000e+00 : f32
    %0 = vector.broadcast %cst : f32 to vector<8x128xf32>
    %c0 = arith.constant 0 : index
    %c0_0 = arith.constant 0 : index
    %1 = vector.load %arg7[%c0, %c0_0] : memref<8x128xf32, #tpu.memory_space<vmem>>, vector<8x128xf32>
    tpu.vector_store %arg7[%c0, %c0_0], %0 {strides = array<i32>} : memref<8x128xf32, #tpu.memory_space<vmem>>, vector<8x128xf32>,
    %c0_i32 = arith.constant 0 : i32
    %2 = arith.cmpi eq, %arg0, %c0_i32 : i32
    %3 = arith.extui %2 : i1 to i32
    %c0_i32_1 = arith.constant 0 : i32
    %4 = arith.cmpi ne, %3, %c0_i32_1 : i32
    scf.if %4 {
      %c0_118 = arith.constant 0 : index
      %c0_119 = arith.constant 0 : index
      %237 = vector.load %arg1[%c0_118, %c0_119] : memref<8x64xf32, #tpu.memory_space<vmem>>, vector<8x64xf32>
      %c0_120 = arith.constant 0 : index
      %c0_121 = arith.constant 0 : index
      %238 = vector.load %arg7[%c0_120, %c0_121] : memref<8x128xf32, #tpu.memory_space<vmem>>, vector<8x64xf32>
      tpu.vector_store %arg7[%c0_120, %c0_121], %237 {strides = array<i32>} : memref<8x128xf32, #tpu.memory_space<vmem>>, vector<8x64xf32>,
    } else {
    }
    %c1_i32 = arith.constant 1 : i32
    %5 = arith.cmpi eq, %arg0, %c1_i32 : i32
    %6 = arith.extui %5 : i1 to i32
    %c0_i32_2 = arith.constant 0 : i32
    %7 = arith.cmpi ne, %6, %c0_i32_2 : i32
    scf.if %7 {
      %c0_118 = arith.constant 0 : index
      %c0_119 = arith.constant 0 : index
      %237 = vector.load %arg2[%c0_118, %c0_119] : memref<8x48xf32, #tpu.memory_space<vmem>>, vector<8x48xf32>
      %c0_120 = arith.constant 0 : index
      %c0_121 = arith.constant 0 : index
      %238 = vector.load %arg7[%c0_120, %c0_121] : memref<8x128xf32, #tpu.memory_space<vmem>>, vector<8x48xf32>
      tpu.vector_store %arg7[%c0_120, %c0_121], %237 {strides = array<i32>} : memref<8x128xf32, #tpu.memory_space<vmem>>, vector<8x48xf32>,
    } else {
    }
    %c0_3 = arith.constant 0 : index
    %c0_4 = arith.constant 0 : index
    %8 = vector.load %arg7[%c0_3, %c0_4] : memref<8x128xf32, #tpu.memory_space<vmem>>, vector<8x128xf32>
    %c0_5 = arith.constant 0 : index
    %c0_6 = arith.constant 0 : index
    %c0_7 = arith.constant 0 : index
    %c0_8 = arith.constant 0 : index
    %9 = vector.load %arg4[%c0_5, %c0_6, %c0_7, %c0_8] : memref<1x8x8x128xf32, #tpu.memory_space<vmem>>, vector<1x1x8x128xf32>
    %10 = vector.shape_cast %9 : vector<1x1x8x128xf32> to vector<8x128xf32>
    %11 = arith.truncf %8 : vector<8x128xf32> to vector<8x128xbf16>
    %c0_9 = arith.constant 0 : index
    %c0_10 = arith.constant 0 : index
    %c0_11 = arith.constant 0 : index
    %c0_12 = arith.constant 0 : index
    %12 = vector.load %arg3[%c0_9, %c0_10, %c0_11, %c0_12] : memref<1x8x128x128xbf16, #tpu.memory_space<vmem>>, vector<1x1x128x128xbf16>
    %13 = vector.shape_cast %12 : vector<1x1x128x128xbf16> to vector<128x128xbf16>
    %cst_13 = arith.constant dense<0.000000e+00> : vector<8x128xf32>
    %14 = tpu.matmul %11, %13, %cst_13 {dimension_numbers = #tpu.dot_dimension_numbers<[1], [0], [0], [1], [0, 0, 1, 1], [], []>} : vector<8x128xbf16>, vector<128x128xbf16>, vector<8x128xf32> -> vector<8x128xf32>
    %cst_14 = arith.constant dense<0.000000e+00> : vector<128xf32>
    %15 = vector.multi_reduction <add>, %14, %cst_14 [0] : vector<8x128xf32> to vector<128xf32>
    %16 = vector.shape_cast %15 : vector<128xf32> to vector<1x128xf32>
    %17 = arith.mulf %14, %14 : vector<8x128xf32>
    %cst_15 = arith.constant dense<0.000000e+00> : vector<128xf32>
    %18 = vector.multi_reduction <add>, %17, %cst_15 [0] : vector<8x128xf32> to vector<128xf32>
    %19 = vector.shape_cast %18 : vector<128xf32> to vector<1x128xf32>
    %cst_16 = arith.constant 1.250000e-01 : f32
    %20 = vector.broadcast %cst_16 : f32 to vector<1x128xf32>
    %21 = arith.mulf %16, %20 : vector<1x128xf32>
    %cst_17 = arith.constant 1.250000e-01 : f32
    %22 = vector.broadcast %cst_17 : f32 to vector<1x128xf32>
    %23 = arith.mulf %19, %22 : vector<1x128xf32>
    %24 = arith.mulf %21, %21 : vector<1x128xf32>
    %25 = arith.subf %23, %24 : vector<1x128xf32>
    %26 = vector.extract_strided_slice %10 {offsets = [1, 0], sizes = [1, 128], strides = [1, 1]} : vector<8x128xf32> to vector<1x128xf32>
    %cst_18 = arith.constant 9.99999974E-6 : f32
    %27 = vector.broadcast %cst_18 : f32 to vector<1x128xf32>
    %28 = arith.addf %25, %27 : vector<1x128xf32>
    %29 = math.rsqrt %28 : vector<1x128xf32>
    %30 = arith.mulf %26, %29 : vector<1x128xf32>
    %31 = vector.extract_strided_slice %10 {offsets = [2, 0], sizes = [1, 128], strides = [1, 1]} : vector<8x128xf32> to vector<1x128xf32>
    %32 = arith.mulf %21, %30 : vector<1x128xf32>
    %33 = arith.subf %31, %32 : vector<1x128xf32>
    %34 = vector.broadcast %30 : vector<1x128xf32> to vector<8x128xf32>
    %35 = arith.mulf %14, %34 : vector<8x128xf32>
    %36 = vector.broadcast %33 : vector<1x128xf32> to vector<8x128xf32>
    %37 = arith.addf %35, %36 : vector<8x128xf32>
    %cst_19 = arith.constant 0.000000e+00 : f32
    %38 = vector.broadcast %cst_19 : f32 to vector<8x128xf32>
    %39 = arith.cmpf oge, %37, %38 : vector<8x128xf32>
    %cst_20 = arith.constant 2.000000e-01 : f32
    %40 = vector.broadcast %cst_20 : f32 to vector<8x128xf32>
    %41 = arith.mulf %40, %37 : vector<8x128xf32>
    %42 = arith.select %39, %37, %41 : vector<8x128xi1>, vector<8x128xf32>
    %c0_21 = arith.constant 0 : index
    %c1 = arith.constant 1 : index
    %c0_22 = arith.constant 0 : index
    %c0_23 = arith.constant 0 : index
    %43 = vector.load %arg4[%c0_21, %c1, %c0_22, %c0_23] : memref<1x8x8x128xf32, #tpu.memory_space<vmem>>, vector<1x1x8x128xf32>
    %44 = vector.shape_cast %43 : vector<1x1x8x128xf32> to vector<8x128xf32>
    %45 = arith.truncf %42 : vector<8x128xf32> to vector<8x128xbf16>
    %c0_24 = arith.constant 0 : index
    %c1_25 = arith.constant 1 : index
    %c0_26 = arith.constant 0 : index
    %c0_27 = arith.constant 0 : index
    %46 = vector.load %arg3[%c0_24, %c1_25, %c0_26, %c0_27] : memref<1x8x128x128xbf16, #tpu.memory_space<vmem>>, vector<1x1x128x128xbf16>
    %47 = vector.shape_cast %46 : vector<1x1x128x128xbf16> to vector<128x128xbf16>
    %cst_28 = arith.constant dense<0.000000e+00> : vector<8x128xf32>
    %48 = tpu.matmul %45, %47, %cst_28 {dimension_numbers = #tpu.dot_dimension_numbers<[1], [0], [0], [1], [0, 0, 1, 1], [], []>} : vector<8x128xbf16>, vector<128x128xbf16>, vector<8x128xf32> -> vector<8x128xf32>
    %cst_29 = arith.constant dense<0.000000e+00> : vector<128xf32>
    %49 = vector.multi_reduction <add>, %48, %cst_29 [0] : vector<8x128xf32> to vector<128xf32>
    %50 = vector.shape_cast %49 : vector<128xf32> to vector<1x128xf32>
    %51 = arith.mulf %48, %48 : vector<8x128xf32>
    %cst_30 = arith.constant dense<0.000000e+00> : vector<128xf32>
    %52 = vector.multi_reduction <add>, %51, %cst_30 [0] : vector<8x128xf32> to vector<128xf32>
    %53 = vector.shape_cast %52 : vector<128xf32> to vector<1x128xf32>
    %cst_31 = arith.constant 1.250000e-01 : f32
    %54 = vector.broadcast %cst_31 : f32 to vector<1x128xf32>
    %55 = arith.mulf %50, %54 : vector<1x128xf32>
    %cst_32 = arith.constant 1.250000e-01 : f32
    %56 = vector.broadcast %cst_32 : f32 to vector<1x128xf32>
    %57 = arith.mulf %53, %56 : vector<1x128xf32>
    %58 = arith.mulf %55, %55 : vector<1x128xf32>
    %59 = arith.subf %57, %58 : vector<1x128xf32>
    %60 = vector.extract_strided_slice %44 {offsets = [1, 0], sizes = [1, 128], strides = [1, 1]} : vector<8x128xf32> to vector<1x128xf32>
    %cst_33 = arith.constant 9.99999974E-6 : f32
    %61 = vector.broadcast %cst_33 : f32 to vector<1x128xf32>
    %62 = arith.addf %59, %61 : vector<1x128xf32>
    %63 = math.rsqrt %62 : vector<1x128xf32>
    %64 = arith.mulf %60, %63 : vector<1x128xf32>
    %65 = vector.extract_strided_slice %44 {offsets = [2, 0], sizes = [1, 128], strides = [1, 1]} : vector<8x128xf32> to vector<1x128xf32>
    %66 = arith.mulf %55, %64 : vector<1x128xf32>
    %67 = arith.subf %65, %66 : vector<1x128xf32>
    %68 = vector.broadcast %64 : vector<1x128xf32> to vector<8x128xf32>
    %69 = arith.mulf %48, %68 : vector<8x128xf32>
    %70 = vector.broadcast %67 : vector<1x128xf32> to vector<8x128xf32>
    %71 = arith.addf %69, %70 : vector<8x128xf32>
    %cst_34 = arith.constant 0.000000e+00 : f32
    %72 = vector.broadcast %cst_34 : f32 to vector<8x128xf32>
    %73 = arith.cmpf oge, %71, %72 : vector<8x128xf32>
    %cst_35 = arith.constant 2.000000e-01 : f32
    %74 = vector.broadcast %cst_35 : f32 to vector<8x128xf32>
    %75 = arith.mulf %74, %71 : vector<8x128xf32>
    %76 = arith.select %73, %71, %75 : vector<8x128xi1>, vector<8x128xf32>
    %c0_36 = arith.constant 0 : index
    %c2 = arith.constant 2 : index
    %c0_37 = arith.constant 0 : index
    %c0_38 = arith.constant 0 : index
    %77 = vector.load %arg4[%c0_36, %c2, %c0_37, %c0_38] : memref<1x8x8x128xf32, #tpu.memory_space<vmem>>, vector<1x1x8x128xf32>
    %78 = vector.shape_cast %77 : vector<1x1x8x128xf32> to vector<8x128xf32>
    %79 = arith.truncf %76 : vector<8x128xf32> to vector<8x128xbf16>
    %c0_39 = arith.constant 0 : index
    %c2_40 = arith.constant 2 : index
    %c0_41 = arith.constant 0 : index
    %c0_42 = arith.constant 0 : index
    %80 = vector.load %arg3[%c0_39, %c2_40, %c0_41, %c0_42] : memref<1x8x128x128xbf16, #tpu.memory_space<vmem>>, vector<1x1x128x128xbf16>
    %81 = vector.shape_cast %80 : vector<1x1x128x128xbf16> to vector<128x128xbf16>
    %cst_43 = arith.constant dense<0.000000e+00> : vector<8x128xf32>
    %82 = tpu.matmul %79, %81, %cst_43 {dimension_numbers = #tpu.dot_dimension_numbers<[1], [0], [0], [1], [0, 0, 1, 1], [], []>} : vector<8x128xbf16>, vector<128x128xbf16>, vector<8x128xf32> -> vector<8x128xf32>
    %cst_44 = arith.constant dense<0.000000e+00> : vector<128xf32>
    %83 = vector.multi_reduction <add>, %82, %cst_44 [0] : vector<8x128xf32> to vector<128xf32>
    %84 = vector.shape_cast %83 : vector<128xf32> to vector<1x128xf32>
    %85 = arith.mulf %82, %82 : vector<8x128xf32>
    %cst_45 = arith.constant dense<0.000000e+00> : vector<128xf32>
    %86 = vector.multi_reduction <add>, %85, %cst_45 [0] : vector<8x128xf32> to vector<128xf32>
    %87 = vector.shape_cast %86 : vector<128xf32> to vector<1x128xf32>
    %cst_46 = arith.constant 1.250000e-01 : f32
    %88 = vector.broadcast %cst_46 : f32 to vector<1x128xf32>
    %89 = arith.mulf %84, %88 : vector<1x128xf32>
    %cst_47 = arith.constant 1.250000e-01 : f32
    %90 = vector.broadcast %cst_47 : f32 to vector<1x128xf32>
    %91 = arith.mulf %87, %90 : vector<1x128xf32>
    %92 = arith.mulf %89, %89 : vector<1x128xf32>
    %93 = arith.subf %91, %92 : vector<1x128xf32>
    %94 = vector.extract_strided_slice %78 {offsets = [1, 0], sizes = [1, 128], strides = [1, 1]} : vector<8x128xf32> to vector<1x128xf32>
    %cst_48 = arith.constant 9.99999974E-6 : f32
    %95 = vector.broadcast %cst_48 : f32 to vector<1x128xf32>
    %96 = arith.addf %93, %95 : vector<1x128xf32>
    %97 = math.rsqrt %96 : vector<1x128xf32>
    %98 = arith.mulf %94, %97 : vector<1x128xf32>
    %99 = vector.extract_strided_slice %78 {offsets = [2, 0], sizes = [1, 128], strides = [1, 1]} : vector<8x128xf32> to vector<1x128xf32>
    %100 = arith.mulf %89, %98 : vector<1x128xf32>
    %101 = arith.subf %99, %100 : vector<1x128xf32>
    %102 = vector.broadcast %98 : vector<1x128xf32> to vector<8x128xf32>
    %103 = arith.mulf %82, %102 : vector<8x128xf32>
    %104 = vector.broadcast %101 : vector<1x128xf32> to vector<8x128xf32>
    %105 = arith.addf %103, %104 : vector<8x128xf32>
    %cst_49 = arith.constant 0.000000e+00 : f32
    %106 = vector.broadcast %cst_49 : f32 to vector<8x128xf32>
    %107 = arith.cmpf oge, %105, %106 : vector<8x128xf32>
    %cst_50 = arith.constant 2.000000e-01 : f32
    %108 = vector.broadcast %cst_50 : f32 to vector<8x128xf32>
    %109 = arith.mulf %108, %105 : vector<8x128xf32>
    %110 = arith.select %107, %105, %109 : vector<8x128xi1>, vector<8x128xf32>
    %c0_51 = arith.constant 0 : index
    %c3 = arith.constant 3 : index
    %c0_52 = arith.constant 0 : index
    %c0_53 = arith.constant 0 : index
    %111 = vector.load %arg4[%c0_51, %c3, %c0_52, %c0_53] : memref<1x8x8x128xf32, #tpu.memory_space<vmem>>, vector<1x1x8x128xf32>
    %112 = vector.shape_cast %111 : vector<1x1x8x128xf32> to vector<8x128xf32>
    %113 = arith.truncf %110 : vector<8x128xf32> to vector<8x128xbf16>
    %c0_54 = arith.constant 0 : index
    %c3_55 = arith.constant 3 : index
    %c0_56 = arith.constant 0 : index
    %c0_57 = arith.constant 0 : index
    %114 = vector.load %arg3[%c0_54, %c3_55, %c0_56, %c0_57] : memref<1x8x128x128xbf16, #tpu.memory_space<vmem>>, vector<1x1x128x128xbf16>
    %115 = vector.shape_cast %114 : vector<1x1x128x128xbf16> to vector<128x128xbf16>
    %cst_58 = arith.constant dense<0.000000e+00> : vector<8x128xf32>
    %116 = tpu.matmul %113, %115, %cst_58 {dimension_numbers = #tpu.dot_dimension_numbers<[1], [0], [0], [1], [0, 0, 1, 1], [], []>} : vector<8x128xbf16>, vector<128x128xbf16>, vector<8x128xf32> -> vector<8x128xf32>
    %117 = vector.extract_strided_slice %112 {offsets = [0, 0], sizes = [1, 128], strides = [1, 1]} : vector<8x128xf32> to vector<1x128xf32>
    %118 = vector.broadcast %117 : vector<1x128xf32> to vector<8x128xf32>
    %119 = arith.addf %116, %118 : vector<8x128xf32>
    %c0_59 = arith.constant 0 : index
    %c0_60 = arith.constant 0 : index
    %c0_61 = arith.constant 0 : index
    %120 = vector.load %arg6[%c0_59, %c0_60, %c0_61] : memref<1x8x128xf32, #tpu.memory_space<vmem>>, vector<1x8x128xf32>
    %121 = vector.shape_cast %120 : vector<1x8x128xf32> to vector<8x128xf32>
    %122 = vector.shape_cast %119 : vector<8x128xf32> to vector<1x8x128xf32>
    tpu.vector_store %arg6[%c0_59, %c0_60, %c0_61], %122 {strides = array<i32>} : memref<1x8x128xf32, #tpu.memory_space<vmem>>, vector<1x8x128xf32>,
    %c0_62 = arith.constant 0 : index
    %c4 = arith.constant 4 : index
    %c0_63 = arith.constant 0 : index
    %c0_64 = arith.constant 0 : index
    %123 = vector.load %arg4[%c0_62, %c4, %c0_63, %c0_64] : memref<1x8x8x128xf32, #tpu.memory_space<vmem>>, vector<1x1x8x128xf32>
    %124 = vector.shape_cast %123 : vector<1x1x8x128xf32> to vector<8x128xf32>
    %125 = arith.truncf %119 : vector<8x128xf32> to vector<8x128xbf16>
    %c0_65 = arith.constant 0 : index
    %c4_66 = arith.constant 4 : index
    %c0_67 = arith.constant 0 : index
    %c0_68 = arith.constant 0 : index
    %126 = vector.load %arg3[%c0_65, %c4_66, %c0_67, %c0_68] : memref<1x8x128x128xbf16, #tpu.memory_space<vmem>>, vector<1x1x128x128xbf16>
    %127 = vector.shape_cast %126 : vector<1x1x128x128xbf16> to vector<128x128xbf16>
    %cst_69 = arith.constant dense<0.000000e+00> : vector<8x128xf32>
    %128 = tpu.matmul %125, %127, %cst_69 {dimension_numbers = #tpu.dot_dimension_numbers<[1], [0], [0], [1], [0, 0, 1, 1], [], []>} : vector<8x128xbf16>, vector<128x128xbf16>, vector<8x128xf32> -> vector<8x128xf32>
    %cst_70 = arith.constant dense<0.000000e+00> : vector<128xf32>
    %129 = vector.multi_reduction <add>, %128, %cst_70 [0] : vector<8x128xf32> to vector<128xf32>
    %130 = vector.shape_cast %129 : vector<128xf32> to vector<1x128xf32>
    %131 = arith.mulf %128, %128 : vector<8x128xf32>
    %cst_71 = arith.constant dense<0.000000e+00> : vector<128xf32>
    %132 = vector.multi_reduction <add>, %131, %cst_71 [0] : vector<8x128xf32> to vector<128xf32>
    %133 = vector.shape_cast %132 : vector<128xf32> to vector<1x128xf32>
    %cst_72 = arith.constant 1.250000e-01 : f32
    %134 = vector.broadcast %cst_72 : f32 to vector<1x128xf32>
    %135 = arith.mulf %130, %134 : vector<1x128xf32>
    %cst_73 = arith.constant 1.250000e-01 : f32
    %136 = vector.broadcast %cst_73 : f32 to vector<1x128xf32>
    %137 = arith.mulf %133, %136 : vector<1x128xf32>
    %138 = arith.mulf %135, %135 : vector<1x128xf32>
    %139 = arith.subf %137, %138 : vector<1x128xf32>
    %140 = vector.extract_strided_slice %124 {offsets = [1, 0], sizes = [1, 128], strides = [1, 1]} : vector<8x128xf32> to vector<1x128xf32>
    %cst_74 = arith.constant 9.99999974E-6 : f32
    %141 = vector.broadcast %cst_74 : f32 to vector<1x128xf32>
    %142 = arith.addf %139, %141 : vector<1x128xf32>
    %143 = math.rsqrt %142 : vector<1x128xf32>
    %144 = arith.mulf %140, %143 : vector<1x128xf32>
    %145 = vector.extract_strided_slice %124 {offsets = [2, 0], sizes = [1, 128], strides = [1, 1]} : vector<8x128xf32> to vector<1x128xf32>
    %146 = arith.mulf %135, %144 : vector<1x128xf32>
    %147 = arith.subf %145, %146 : vector<1x128xf32>
    %148 = vector.broadcast %144 : vector<1x128xf32> to vector<8x128xf32>
    %149 = arith.mulf %128, %148 : vector<8x128xf32>
    %150 = vector.broadcast %147 : vector<1x128xf32> to vector<8x128xf32>
    %151 = arith.addf %149, %150 : vector<8x128xf32>
    %cst_75 = arith.constant 0.000000e+00 : f32
    %152 = vector.broadcast %cst_75 : f32 to vector<8x128xf32>
    %153 = arith.cmpf oge, %151, %152 : vector<8x128xf32>
    %cst_76 = arith.constant 2.000000e-01 : f32
    %154 = vector.broadcast %cst_76 : f32 to vector<8x128xf32>
    %155 = arith.mulf %154, %151 : vector<8x128xf32>
    %156 = arith.select %153, %151, %155 : vector<8x128xi1>, vector<8x128xf32>
    %c0_77 = arith.constant 0 : index
    %c5 = arith.constant 5 : index
    %c0_78 = arith.constant 0 : index
    %c0_79 = arith.constant 0 : index
    %157 = vector.load %arg4[%c0_77, %c5, %c0_78, %c0_79] : memref<1x8x8x128xf32, #tpu.memory_space<vmem>>, vector<1x1x8x128xf32>
    %158 = vector.shape_cast %157 : vector<1x1x8x128xf32> to vector<8x128xf32>
    %159 = arith.truncf %156 : vector<8x128xf32> to vector<8x128xbf16>
    %c0_80 = arith.constant 0 : index
    %c5_81 = arith.constant 5 : index
    %c0_82 = arith.constant 0 : index
    %c0_83 = arith.constant 0 : index
    %160 = vector.load %arg3[%c0_80, %c5_81, %c0_82, %c0_83] : memref<1x8x128x128xbf16, #tpu.memory_space<vmem>>, vector<1x1x128x128xbf16>
    %161 = vector.shape_cast %160 : vector<1x1x128x128xbf16> to vector<128x128xbf16>
    %cst_84 = arith.constant dense<0.000000e+00> : vector<8x128xf32>
    %162 = tpu.matmul %159, %161, %cst_84 {dimension_numbers = #tpu.dot_dimension_numbers<[1], [0], [0], [1], [0, 0, 1, 1], [], []>} : vector<8x128xbf16>, vector<128x128xbf16>, vector<8x128xf32> -> vector<8x128xf32>
    %cst_85 = arith.constant dense<0.000000e+00> : vector<128xf32>
    %163 = vector.multi_reduction <add>, %162, %cst_85 [0] : vector<8x128xf32> to vector<128xf32>
    %164 = vector.shape_cast %163 : vector<128xf32> to vector<1x128xf32>
    %165 = arith.mulf %162, %162 : vector<8x128xf32>
    %cst_86 = arith.constant dense<0.000000e+00> : vector<128xf32>
    %166 = vector.multi_reduction <add>, %165, %cst_86 [0] : vector<8x128xf32> to vector<128xf32>
    %167 = vector.shape_cast %166 : vector<128xf32> to vector<1x128xf32>
    %cst_87 = arith.constant 1.250000e-01 : f32
    %168 = vector.broadcast %cst_87 : f32 to vector<1x128xf32>
    %169 = arith.mulf %164, %168 : vector<1x128xf32>
    %cst_88 = arith.constant 1.250000e-01 : f32
    %170 = vector.broadcast %cst_88 : f32 to vector<1x128xf32>
    %171 = arith.mulf %167, %170 : vector<1x128xf32>
    %172 = arith.mulf %169, %169 : vector<1x128xf32>
    %173 = arith.subf %171, %172 : vector<1x128xf32>
    %174 = vector.extract_strided_slice %158 {offsets = [1, 0], sizes = [1, 128], strides = [1, 1]} : vector<8x128xf32> to vector<1x128xf32>
    %cst_89 = arith.constant 9.99999974E-6 : f32
    %175 = vector.broadcast %cst_89 : f32 to vector<1x128xf32>
    %176 = arith.addf %173, %175 : vector<1x128xf32>
    %177 = math.rsqrt %176 : vector<1x128xf32>
    %178 = arith.mulf %174, %177 : vector<1x128xf32>
    %179 = vector.extract_strided_slice %158 {offsets = [2, 0], sizes = [1, 128], strides = [1, 1]} : vector<8x128xf32> to vector<1x128xf32>
    %180 = arith.mulf %169, %178 : vector<1x128xf32>
    %181 = arith.subf %179, %180 : vector<1x128xf32>
    %182 = vector.broadcast %178 : vector<1x128xf32> to vector<8x128xf32>
    %183 = arith.mulf %162, %182 : vector<8x128xf32>
    %184 = vector.broadcast %181 : vector<1x128xf32> to vector<8x128xf32>
    %185 = arith.addf %183, %184 : vector<8x128xf32>
    %cst_90 = arith.constant 0.000000e+00 : f32
    %186 = vector.broadcast %cst_90 : f32 to vector<8x128xf32>
    %187 = arith.cmpf oge, %185, %186 : vector<8x128xf32>
    %cst_91 = arith.constant 2.000000e-01 : f32
    %188 = vector.broadcast %cst_91 : f32 to vector<8x128xf32>
    %189 = arith.mulf %188, %185 : vector<8x128xf32>
    %190 = arith.select %187, %185, %189 : vector<8x128xi1>, vector<8x128xf32>
    %c0_92 = arith.constant 0 : index
    %c6 = arith.constant 6 : index
    %c0_93 = arith.constant 0 : index
    %c0_94 = arith.constant 0 : index
    %191 = vector.load %arg4[%c0_92, %c6, %c0_93, %c0_94] : memref<1x8x8x128xf32, #tpu.memory_space<vmem>>, vector<1x1x8x128xf32>
    %192 = vector.shape_cast %191 : vector<1x1x8x128xf32> to vector<8x128xf32>
    %193 = arith.truncf %190 : vector<8x128xf32> to vector<8x128xbf16>
    %c0_95 = arith.constant 0 : index
    %c6_96 = arith.constant 6 : index
    %c0_97 = arith.constant 0 : index
    %c0_98 = arith.constant 0 : index
    %194 = vector.load %arg3[%c0_95, %c6_96, %c0_97, %c0_98] : memref<1x8x128x128xbf16, #tpu.memory_space<vmem>>, vector<1x1x128x128xbf16>
    %195 = vector.shape_cast %194 : vector<1x1x128x128xbf16> to vector<128x128xbf16>
    %cst_99 = arith.constant dense<0.000000e+00> : vector<8x128xf32>
    %196 = tpu.matmul %193, %195, %cst_99 {dimension_numbers = #tpu.dot_dimension_numbers<[1], [0], [0], [1], [0, 0, 1, 1], [], []>} : vector<8x128xbf16>, vector<128x128xbf16>, vector<8x128xf32> -> vector<8x128xf32>
    %cst_100 = arith.constant dense<0.000000e+00> : vector<128xf32>
    %197 = vector.multi_reduction <add>, %196, %cst_100 [0] : vector<8x128xf32> to vector<128xf32>
    %198 = vector.shape_cast %197 : vector<128xf32> to vector<1x128xf32>
    %199 = arith.mulf %196, %196 : vector<8x128xf32>
    %cst_101 = arith.constant dense<0.000000e+00> : vector<128xf32>
    %200 = vector.multi_reduction <add>, %199, %cst_101 [0] : vector<8x128xf32> to vector<128xf32>
    %201 = vector.shape_cast %200 : vector<128xf32> to vector<1x128xf32>
    %cst_102 = arith.constant 1.250000e-01 : f32
    %202 = vector.broadcast %cst_102 : f32 to vector<1x128xf32>
    %203 = arith.mulf %198, %202 : vector<1x128xf32>
    %cst_103 = arith.constant 1.250000e-01 : f32
    %204 = vector.broadcast %cst_103 : f32 to vector<1x128xf32>
    %205 = arith.mulf %201, %204 : vector<1x128xf32>
    %206 = arith.mulf %203, %203 : vector<1x128xf32>
    %207 = arith.subf %205, %206 : vector<1x128xf32>
    %208 = vector.extract_strided_slice %192 {offsets = [1, 0], sizes = [1, 128], strides = [1, 1]} : vector<8x128xf32> to vector<1x128xf32>
    %cst_104 = arith.constant 9.99999974E-6 : f32
    %209 = vector.broadcast %cst_104 : f32 to vector<1x128xf32>
    %210 = arith.addf %207, %209 : vector<1x128xf32>
    %211 = math.rsqrt %210 : vector<1x128xf32>
    %212 = arith.mulf %208, %211 : vector<1x128xf32>
    %213 = vector.extract_strided_slice %192 {offsets = [2, 0], sizes = [1, 128], strides = [1, 1]} : vector<8x128xf32> to vector<1x128xf32>
    %214 = arith.mulf %203, %212 : vector<1x128xf32>
    %215 = arith.subf %213, %214 : vector<1x128xf32>
    %216 = vector.broadcast %212 : vector<1x128xf32> to vector<8x128xf32>
    %217 = arith.mulf %196, %216 : vector<8x128xf32>
    %218 = vector.broadcast %215 : vector<1x128xf32> to vector<8x128xf32>
    %219 = arith.addf %217, %218 : vector<8x128xf32>
    %cst_105 = arith.constant 0.000000e+00 : f32
    %220 = vector.broadcast %cst_105 : f32 to vector<8x128xf32>
    %221 = arith.cmpf oge, %219, %220 : vector<8x128xf32>
    %cst_106 = arith.constant 2.000000e-01 : f32
    %222 = vector.broadcast %cst_106 : f32 to vector<8x128xf32>
    %223 = arith.mulf %222, %219 : vector<8x128xf32>
    %224 = arith.select %221, %219, %223 : vector<8x128xi1>, vector<8x128xf32>
    %c0_107 = arith.constant 0 : index
    %c7 = arith.constant 7 : index
    %c0_108 = arith.constant 0 : index
    %c0_109 = arith.constant 0 : index
    %225 = vector.load %arg4[%c0_107, %c7, %c0_108, %c0_109] : memref<1x8x8x128xf32, #tpu.memory_space<vmem>>, vector<1x1x8x128xf32>
    %226 = vector.shape_cast %225 : vector<1x1x8x128xf32> to vector<8x128xf32>
    %227 = arith.truncf %224 : vector<8x128xf32> to vector<8x128xbf16>
    %c0_110 = arith.constant 0 : index
    %c7_111 = arith.constant 7 : index
    %c0_112 = arith.constant 0 : index
    %c0_113 = arith.constant 0 : index
    %228 = vector.load %arg3[%c0_110, %c7_111, %c0_112, %c0_113] : memref<1x8x128x128xbf16, #tpu.memory_space<vmem>>, vector<1x1x128x128xbf16>
    %229 = vector.shape_cast %228 : vector<1x1x128x128xbf16> to vector<128x128xbf16>
    %cst_114 = arith.constant dense<0.000000e+00> : vector<8x128xf32>
    %230 = tpu.matmul %227, %229, %cst_114 {dimension_numbers = #tpu.dot_dimension_numbers<[1], [0], [0], [1], [0, 0, 1, 1], [], []>} : vector<8x128xbf16>, vector<128x128xbf16>, vector<8x128xf32> -> vector<8x128xf32>
    %231 = vector.extract_strided_slice %226 {offsets = [0, 0], sizes = [1, 128], strides = [1, 1]} : vector<8x128xf32> to vector<1x128xf32>
    %232 = vector.broadcast %231 : vector<1x128xf32> to vector<8x128xf32>
    %233 = arith.addf %230, %232 : vector<8x128xf32>
    %c0_115 = arith.constant 0 : index
    %c0_116 = arith.constant 0 : index
    %c0_117 = arith.constant 0 : index
    %234 = vector.load %arg5[%c0_115, %c0_116, %c0_117] : memref<1x8x128xf32, #tpu.memory_space<vmem>>, vector<1x8x128xf32>
    %235 = vector.shape_cast %234 : vector<1x8x128xf32> to vector<8x128xf32>
    %236 = vector.shape_cast %233 : vector<8x128xf32> to vector<1x8x128xf32>
    tpu.vector_store %arg5[%c0_115, %c0_116, %c0_117], %236 {strides = array<i32>} : memref<1x8x128xf32, #tpu.memory_space<vmem>>, vector<1x8x128xf32>,
    return
  }
  func.func @transform_0(%arg0: i32) -> (i32, i32) {
    %c0_i32 = arith.constant 0 : i32
    %c0_i32_0 = arith.constant 0 : i32
    %c0_i32_1 = arith.constant 0 : i32
    return %c0_i32, %c0_i32_0 : i32, i32
  }
  func.func @transform_1(%arg0: i32) -> (i32, i32) {
    %c0_i32 = arith.constant 0 : i32
    %c0_i32_0 = arith.constant 0 : i32
    %c0_i32_1 = arith.constant 0 : i32
    return %c0_i32, %c0_i32_0 : i32, i32
  }
  func.func @transform_2(%arg0: i32) -> (i32, i32, i32, i32) {
    %c0_i32 = arith.constant 0 : i32
    %c0_i32_0 = arith.constant 0 : i32
    %c0_i32_1 = arith.constant 0 : i32
    %c0_i32_2 = arith.constant 0 : i32
    return %arg0, %c0_i32, %c0_i32_0, %c0_i32_1 : i32, i32, i32, i32
  }
  func.func @transform_3(%arg0: i32) -> (i32, i32, i32, i32) {
    %c0_i32 = arith.constant 0 : i32
    %c0_i32_0 = arith.constant 0 : i32
    %c0_i32_1 = arith.constant 0 : i32
    %c0_i32_2 = arith.constant 0 : i32
    return %arg0, %c0_i32, %c0_i32_0, %c0_i32_1 : i32, i32, i32, i32
  }
  func.func @transform_4(%arg0: i32) -> (i32, i32, i32) {
    %c0_i32 = arith.constant 0 : i32
    %c0_i32_0 = arith.constant 0 : i32
    %c0_i32_1 = arith.constant 0 : i32
    return %arg0, %c0_i32, %c0_i32_0 : i32, i32, i32
  }
  func.func @transform_5(%arg0: i32) -> (i32, i32, i32) {
    %c0_i32 = arith.constant 0 : i32
    %c0_i32_0 = arith.constant 0 : i32
    %c0_i32_1 = arith.constant 0 : i32
    return %arg0, %c0_i32, %c0_i32_0 : i32, i32, i32
  }
}

</mosaic_0001>

<llo_original>
// kernel: ae_unpaired_forward.1
$region0: #{ae_unpaired_forward.1}
  #allocation0 [shape = 'u32[]', space=smem, size = 0x4, offset = 0x4, fixed_abs, tag = 'smem constant byte address 0x4 - core index']
  #allocation1 [shape = 'u32[144,128]{1,0:T(1,128)}', space=vmem, size = 0x12000, scoped, tag = 'internal scratch']
  #allocation2 [shape = 'f32[8,128]{1,0:T(8,128)}', space=vmem, size = 0x1000, scoped, tag = 'scratch operand']
  %s0 = inlined_call_operand.hbm [shape: f32[8,64], index: 0, kind: input, shape index: {}]
  %s1 = inlined_call_operand.hbm [shape: f32[8,48], index: 1, kind: input, shape index: {}]
  %s2 = inlined_call_operand.hbm [shape: bf16[2,8,128,128], index: 2, kind: input, shape index: {}]
  %s3 = inlined_call_operand.hbm [shape: f32[2,8,8,128], index: 3, kind: input, shape index: {}]
  %s4 = inlined_call_operand.vmem [shape: f32[2,8,128], index: 4, kind: output, shape index: {0}]
  %s5 = inlined_call_operand.vmem [shape: f32[2,8,128], index: 5, kind: output, shape index: {1}]
  %6 = xla_tuple %s4, %s5
  %s7 = sld [smem:[#allocation0]]
  $region81: #{ae_unpaired_forward.1} parent=0
    _
  %s9 = ssub.s32 1, %s7
  %s10 = scalar_select 0, %s9, %s7
  $region1: #{ae_unpaired_forward.1} parent=0
    #allocation3 [shape = 'u8[4096]{0}', space=vmem, size = 0x1000, scoped, tag = 'input window, operand 0, single buffered']
    #allocation4 [shape = 's32[2]{0}', space=sflag, size = 0x8, scoped, tag = 'scoped memory for ae_unpaired_forward.1']
    #allocation5 [shape = 'u8[4096]{0}', space=vmem, size = 0x1000, scoped, tag = 'input window, operand 1, single buffered']
    #allocation6 [shape = 's32[1]{0}', space=sflag, size = 0x4, scoped, tag = 'scoped memory for ae_unpaired_forward.1']
    #allocation7 [shape = 'u8[524288]{0}', space=vmem, size = 0x80000, scoped, tag = 'input window, operand 2']
    #allocation8 [shape = 'u8[65536]{0}', space=vmem, size = 0x10000, scoped, tag = 'input window, operand 3']
    %11 = vsyncpa [#allocation4], 0
    %12 = vsyncpa [#allocation6], 0
    loop: start=0, step=1, limit=4
    $region2: #{ae_unpaired_forward.1} parent=1 // loop_pre_header
      _
    $region3: #{ae_unpaired_forward.1} parent=1 // loop_header
      %s14 = sphi 0, %s18
      %p15 = scmp.ge.s32.totalorder %s14, 4
      %s22 = sphi 0, %s22
      %s24 = sphi 0, %s22
      %s25 = sphi 0, %s24
      %s39 = sphi 0, %s25
      %s43 = sphi 0, %s43
      %s45 = sphi 0, %s43
      %s46 = sphi 0, %s45
      %s60 = sphi 0, %s46
      %s66 = sphi 0, %s68
      %s69 = sphi 0, %s66
      %s70 = sphi 0, %s69
      %s86 = sphi 0, %s70
      %s92 = sphi 0, %s94
      %s95 = sphi 0, %s92
      %s96 = sphi 0, %s95
      %s112 = sphi 0, %s96
      %s118 = sphi 0, %s120
      %s121 = sphi 0, %s118
      %s122 = sphi 0, %s121
      %s138 = sphi 0, %s122
      %s144 = sphi 0, %s146
      %s147 = sphi 0, %s144
      %s148 = sphi 0, %s147
      %s164 = sphi 0, %s148
    $region4: #{ae_unpaired_forward.1} parent=1 // loop_header_branch
      %17 = sbr.rel (%p15) target = $region8
    $region5: #{ae_unpaired_forward.1} parent=1 // loop_body
      %s19 = ssub.s32 %s14, 1
      %s20 = ssub.s32 %s14, 2
      %s21 = sadd.s32 %s14, 1
      %s23 = sadd.s32 %s22, 1
      %p26 = scmp.eq.s32.totalorder %s14, 1
      %p27 = scmp.ne.s32.totalorder %s22, %s24
      %p28 = scmp.eq.s32.totalorder %s14, 0
      %p29 = por %p27, %p28
      %p30 = scmp.ne.s32.totalorder %s22, %s24
      %p31 = scmp.eq.s32.totalorder %s19, 1
      %p32 = por %p30, %p31
      %p33 = scmp.ne.s32.totalorder %s24, %s25
      %p34 = scmp.eq.s32.totalorder %s19, 0
      %p35 = por %p33, %p34
      %p36 = scmp.ne.s32.totalorder %s24, %s25
      %p37 = scmp.eq.s32.totalorder %s20, 1
      %p38 = por %p36, %p37
      %p40 = scmp.ne.s32.totalorder %s25, %s39
      %p41 = scmp.eq.s32.totalorder %s20, 0
      %p42 = por %p40, %p41
      %s44 = sadd.s32 %s43, 1
      %p47 = scmp.eq.s32.totalorder %s14, 1
      %p48 = scmp.ne.s32.totalorder %s43, %s45
      %p49 = scmp.eq.s32.totalorder %s14, 0
      %p50 = por %p48, %p49
      %p51 = scmp.ne.s32.totalorder %s43, %s45
      %p52 = scmp.eq.s32.totalorder %s19, 1
      %p53 = por %p51, %p52
      %p54 = scmp.ne.s32.totalorder %s45, %s46
      %p55 = scmp.eq.s32.totalorder %s19, 0
      %p56 = por %p54, %p55
      %p57 = scmp.ne.s32.totalorder %s45, %s46
      %p58 = scmp.eq.s32.totalorder %s20, 1
      %p59 = por %p57, %p58
      %p61 = scmp.ne.s32.totalorder %s46, %s60
      %p62 = scmp.eq.s32.totalorder %s20, 0
      %p63 = por %p61, %p62
      %s64 = ssub.s32 %s14, %s21
      %p65 = scmp.eq.s32.totalorder %s64, 0
      %s67 = sadd.s32 %s66, 1
      %s68 = scalar_select %p65, %s66, %s67
      %p71 = pneg %p65
      %p72 = scmp.eq.s32.totalorder %s14, 1
      %p73 = por %p71, %p72
      %p74 = scmp.ne.s32.totalorder %s66, %s69
      %p75 = scmp.eq.s32.totalorder %s14, 0
      %p76 = por %p74, %p75
      %p77 = scmp.ne.s32.totalorder %s66, %s69
      %p78 = scmp.eq.s32.totalorder %s19, 1
      %p79 = por %p77, %p78
      %p80 = scmp.ne.s32.totalorder %s69, %s70
      %p81 = scmp.eq.s32.totalorder %s19, 0
      %p82 = por %p80, %p81
      %p83 = scmp.ne.s32.totalorder %s69, %s70
      %p84 = scmp.eq.s32.totalorder %s20, 1
      %p85 = por %p83, %p84
      %p87 = scmp.ne.s32.totalorder %s70, %s86
      %p88 = scmp.eq.s32.totalorder %s20, 0
      %p89 = por %p87, %p88
      %s90 = ssub.s32 %s14, %s21
      %p91 = scmp.eq.s32.totalorder %s90, 0
      %s93 = sadd.s32 %s92, 1
      %s94 = scalar_select %p91, %s92, %s93
      %p97 = pneg %p91
      %p98 = scmp.eq.s32.totalorder %s14, 1
      %p99 = por %p97, %p98
      %p100 = scmp.ne.s32.totalorder %s92, %s95
      %p101 = scmp.eq.s32.totalorder %s14, 0
      %p102 = por %p100, %p101
      %p103 = scmp.ne.s32.totalorder %s92, %s95
      %p104 = scmp.eq.s32.totalorder %s19, 1
      %p105 = por %p103, %p104
      %p106 = scmp.ne.s32.totalorder %s95, %s96
      %p107 = scmp.eq.s32.totalorder %s19, 0
      %p108 = por %p106, %p107
      %p109 = scmp.ne.s32.totalorder %s95, %s96
      %p110 = scmp.eq.s32.totalorder %s20, 1
      %p111 = por %p109, %p110
      %p113 = scmp.ne.s32.totalorder %s96, %s112
      %p114 = scmp.eq.s32.totalorder %s20, 0
      %p115 = por %p113, %p114
      %s116 = ssub.s32 %s14, %s21
      %p117 = scmp.eq.s32.totalorder %s116, 0
      %s119 = sadd.s32 %s118, 1
      %s120 = scalar_select %p117, %s118, %s119
      %p123 = pneg %p117
      %p124 = scmp.eq.s32.totalorder %s14, 1
      %p125 = por %p123, %p124
      %p126 = scmp.ne.s32.totalorder %s118, %s121
      %p127 = scmp.eq.s32.totalorder %s14, 0
      %p128 = por %p126, %p127
      %p129 = scmp.ne.s32.totalorder %s118, %s121
      %p130 = scmp.eq.s32.totalorder %s19, 1
      %p131 = por %p129, %p130
      %p132 = scmp.ne.s32.totalorder %s121, %s122
      %p133 = scmp.eq.s32.totalorder %s19, 0
      %p134 = por %p132, %p133
      %p135 = scmp.ne.s32.totalorder %s121, %s122
      %p136 = scmp.eq.s32.totalorder %s20, 1
      %p137 = por %p135, %p136
      %p139 = scmp.ne.s32.totalorder %s122, %s138
      %p140 = scmp.eq.s32.totalorder %s20, 0
      %p141 = por %p139, %p140
      %s142 = ssub.s32 %s14, %s21
      %p143 = scmp.eq.s32.totalorder %s142, 0
      %s145 = sadd.s32 %s144, 1
      %s146 = scalar_select %p143, %s144, %s145
      %p149 = pneg %p143
      %p150 = scmp.eq.s32.totalorder %s14, 1
      %p151 = por %p149, %p150
      %p152 = scmp.ne.s32.totalorder %s144, %s147
      %p153 = scmp.eq.s32.totalorder %s14, 0
      %p154 = por %p152, %p153
      %p155 = scmp.ne.s32.totalorder %s144, %s147
      %p156 = scmp.eq.s32.totalorder %s19, 1
      %p157 = por %p155, %p156
      %p158 = scmp.ne.s32.totalorder %s147, %s148
      %p159 = scmp.eq.s32.totalorder %s19, 0
      %p160 = por %p158, %p159
      %p161 = scmp.ne.s32.totalorder %s147, %s148
      %p162 = scmp.eq.s32.totalorder %s20, 1
      %p163 = por %p161, %p162
      %p165 = scmp.ne.s32.totalorder %s148, %s164
      %p166 = scmp.eq.s32.totalorder %s20, 0
      %p167 = por %p165, %p166
      %p168 = scmp.le.s32.totalorder 1, %s14
      %p169 = scmp.lt.s32.totalorder %s14, 3
      %p170 = pnand %p168, %p169
      %p171 = pneg %p170
      // Predicated region
      $region9: #{ae_unpaired_forward.1} parent=5 // pred_check
        _
      $region10: #{ae_unpaired_forward.1} parent=5 // pred_check_branch
        %173 = sbr.rel (%p170) target = $region12
      $region11: #{ae_unpaired_forward.1} parent=5 // pred_region
        %s174 = ssub.s32 %s14, 1
        // Predicated region
        $region13: #{ae_unpaired_forward.1} parent=11 // pred_check
          %p175 = pneg %p35
        $region14: #{ae_unpaired_forward.1} parent=11 // pred_check_branch
          %177 = sbr.rel (%p175) target = $region16
        $region15: #{ae_unpaired_forward.1} parent=11 // pred_region
          %s179 = ssub.s32 128, 128
          %180 = vsyncadd [#allocation4], %s179
          %s182 = sshll.u32 [#allocation3], 4
          %s183 = int_to_ptr.vmem [resolvable:$true] %s182
          %185 = dma.hbm_to_vmem [thread:$0]  %s0, 128, %s183, [#allocation4]
        $region16: #{ae_unpaired_forward.1} parent=11 // pred_fallthru
          _
        // Predicated region
        $region17: #{ae_unpaired_forward.1} parent=11 // pred_check
          %p186 = pneg %p56
        $region18: #{ae_unpaired_forward.1} parent=11 // pred_check_branch
          %188 = sbr.rel (%p186) target = $region20
        $region19: #{ae_unpaired_forward.1} parent=11 // pred_region
          %s190 = ssub.s32 128, 128
          %191 = vsyncadd [#allocation6], %s190
          %s193 = sshll.u32 [#allocation5], 4
          %s194 = int_to_ptr.vmem [resolvable:$true] %s193
          %196 = dma.hbm_to_vmem [thread:$0]  %s1, 128, %s194, [#allocation6]
        $region20: #{ae_unpaired_forward.1} parent=11 // pred_fallthru
          _
      $region12: #{ae_unpaired_forward.1} parent=5 // pred_fallthru
        _
      %p197 = scmp.lt.s32.totalorder %s14, 2
      // Predicated region
      $region21: #{ae_unpaired_forward.1} parent=5 // pred_check
        %p198 = pneg %p197
      $region22: #{ae_unpaired_forward.1} parent=5 // pred_check_branch
        %200 = sbr.rel (%p198) target = $region24
      $region23: #{ae_unpaired_forward.1} parent=5 // pred_region
        // Predicated region
        $region25: #{ae_unpaired_forward.1} parent=23 // pred_check
          %p201 = pneg %p76
        $region26: #{ae_unpaired_forward.1} parent=23 // pred_check_branch
          %203 = sbr.rel (%p201) target = $region28
        $region27: #{ae_unpaired_forward.1} parent=23 // pred_region
          %s204 = sand.u32 %s14, 1
          %s205 = scalar_lea.sflag [#allocation4], %s204
          %s206 = sand.u32 %s66, 1
          %s207 = smul.addr %s206, 512
          %s208 = scalar_lea.vmem [#allocation7], %s207
          %s210 = ssub.s32 8192, 8192
          %211 = vsyncadd %s205, %s210
          %s212 = smul.addr %s14, 128
          %s213 = smul.addr %s212, 64
          %s214 = scalar_lea.hbm %s2, %s213
          %s215 = sshll.u32 %s208, 4
          %s216 = int_to_ptr.vmem [resolvable:$true] %s215
          %221 = dma.hbm_to_vmem [thread:$0]  %s214, 8192, %s216, %s205, 64, 64, 4
        $region28: #{ae_unpaired_forward.1} parent=23 // pred_fallthru
          _
        // Predicated region
        $region29: #{ae_unpaired_forward.1} parent=23 // pred_check
          %p222 = pneg %p102
        $region30: #{ae_unpaired_forward.1} parent=23 // pred_check_branch
          %224 = sbr.rel (%p222) target = $region32
        $region31: #{ae_unpaired_forward.1} parent=23 // pred_region
          %s225 = sand.u32 %s14, 1
          %s226 = scalar_lea.sflag [#allocation4], %s225
          %s227 = sand.u32 %s92, 1
          %s228 = smul.addr %s227, 64
          %s229 = scalar_lea.vmem [#allocation8], %s228
          %s231 = ssub.s32 1024, 1024
          %232 = vsyncadd %s226, %s231
          %s233 = smul.addr %s14, 8
          %s234 = smul.addr %s233, 128
          %s235 = scalar_lea.hbm %s3, %s234
          %s236 = sshll.u32 %s229, 4
          %s237 = int_to_ptr.vmem [resolvable:$true] %s236
          %242 = dma.hbm_to_vmem [thread:$0]  %s235, 1024, %s237, %s226, 128, 128, 8
        $region32: #{ae_unpaired_forward.1} parent=23 // pred_fallthru
          _
      $region24: #{ae_unpaired_forward.1} parent=5 // pred_fallthru
        _
      %p243 = scmp.le.s32.totalorder 1, %s14
      %p244 = scmp.lt.s32.totalorder %s14, 3
      %p245 = pnand %p243, %p244
      %p246 = pneg %p245
      // Predicated region
      $region33: #{ae_unpaired_forward.1} parent=5 // pred_check
        _
      $region34: #{ae_unpaired_forward.1} parent=5 // pred_check_branch
        %248 = sbr.rel (%p245) target = $region36
      $region35: #{ae_unpaired_forward.1} parent=5 // pred_region
        %s249 = ssub.s32 %s14, 1
        // Predicated region
        $region37: #{ae_unpaired_forward.1} parent=35 // pred_check
          %p250 = pneg %p35
        $region38: #{ae_unpaired_forward.1} parent=35 // pred_check_branch
          %252 = sbr.rel (%p250) target = $region40
        $region39: #{ae_unpaired_forward.1} parent=35 // pred_region
          %253 = dma.done [#allocation4], 128
        $region40: #{ae_unpaired_forward.1} parent=35 // pred_fallthru
          _
        // Predicated region
        $region41: #{ae_unpaired_forward.1} parent=35 // pred_check
          %p254 = pneg %p56
        $region42: #{ae_unpaired_forward.1} parent=35 // pred_check_branch
          %256 = sbr.rel (%p254) target = $region44
        $region43: #{ae_unpaired_forward.1} parent=35 // pred_region
          %257 = dma.done [#allocation6], 128
        $region44: #{ae_unpaired_forward.1} parent=35 // pred_fallthru
          _
        %s258 = sand.u32 %s19, 1
        %s259 = scalar_lea.sflag [#allocation4], %s258
        %s260 = sand.u32 %s69, 1
        %s261 = smul.addr %s260, 512
        %s262 = scalar_lea.vmem [#allocation7], %s261
        // Predicated region
        $region45: #{ae_unpaired_forward.1} parent=35 // pred_check
          %p263 = pneg %p82
        $region46: #{ae_unpaired_forward.1} parent=35 // pred_check_branch
          %265 = sbr.rel (%p263) target = $region48
        $region47: #{ae_unpaired_forward.1} parent=35 // pred_region
          %266 = dma.done %s259, 8192
        $region48: #{ae_unpaired_forward.1} parent=35 // pred_fallthru
          _
        %s267 = sand.u32 %s19, 1
        %s268 = scalar_lea.sflag [#allocation4], %s267
        %s269 = sand.u32 %s95, 1
        %s270 = smul.addr %s269, 64
        %s271 = scalar_lea.vmem [#allocation8], %s270
        // Predicated region
        $region49: #{ae_unpaired_forward.1} parent=35 // pred_check
          %p272 = pneg %p108
        $region50: #{ae_unpaired_forward.1} parent=35 // pred_check_branch
          %274 = sbr.rel (%p272) target = $region52
        $region51: #{ae_unpaired_forward.1} parent=35 // pred_region
          %275 = dma.done %s268, 1024
        $region52: #{ae_unpaired_forward.1} parent=35 // pred_fallthru
          _
        %p276 = pneg %p35
        %p277 = pneg %p32
        %p278 = pneg %p56
        %p279 = pneg %p53
        %s280 = sand.u32 %s19, 1
        %s281 = scalar_lea.sflag [#allocation4], %s280
        %s282 = sand.u32 %s69, 1
        %s283 = smul.addr %s282, 512
        %s284 = scalar_lea.vmem [#allocation7], %s283
        %p285 = pneg %p82
        %p286 = pneg %p79
        %s287 = sand.u32 %s19, 1
        %s288 = scalar_lea.sflag [#allocation4], %s287
        %s289 = sand.u32 %s95, 1
        %s290 = smul.addr %s289, 64
        %s291 = scalar_lea.vmem [#allocation8], %s290
        %p292 = pneg %p108
        %p293 = pneg %p105
        %p294 = pneg %p134
        %p295 = pneg %p131
        %p296 = scmp.lt.s32.totalorder %s19, 1
        %s297 = scalar_select %p296, %s19, 1
        %s298 = smul.addr %s297, 8
        %s299 = scalar_lea.vmem %s4, %s298
        %p300 = pneg %p160
        %p301 = pneg %p157
        %p302 = scmp.lt.s32.totalorder %s19, 1
        %s303 = scalar_select %p302, %s19, 1
        %s304 = smul.addr %s303, 8
        %s305 = scalar_lea.vmem %s5, %s304
        %p306 = scmp.lt.s32.totalorder %s19, 1
        %s307 = scalar_select %p306, %s19, 1
        %s308 = smul.addr %s307, 8
        %s309 = scalar_lea.vmem %s4, %s308
        %p310 = scmp.lt.s32.totalorder %s19, 1
        %s311 = scalar_select %p310, %s19, 1
        %s312 = smul.addr %s311, 8
        %s313 = scalar_lea.vmem %s5, %s312
        %315 = vst [vmem:[#allocation2] sm:$0xff] 0.0
        %p316 = scmp.eq.s32.totalorder %s19, 0
        // Predicated region
        $region53: #{ae_unpaired_forward.1} parent=35 // pred_check
          %p317 = pneg %p316
        $region54: #{ae_unpaired_forward.1} parent=35 // pred_check_branch
          %319 = sbr.rel (%p317) target = $region56
        $region55: #{ae_unpaired_forward.1} parent=35 // pred_region
          %v320 = vld [vmem:[#allocation3] sm:$0xff]
          %vm321 = vcmask 523264
          %322 = vst.msk [vmem:[#allocation2] sm:$0xff] %vm321, %v320
        $region56: #{ae_unpaired_forward.1} parent=35 // pred_fallthru
          _
        %p323 = scmp.eq.s32.totalorder %s19, 1
        // Predicated region
        $region57: #{ae_unpaired_forward.1} parent=35 // pred_check
          %p324 = pneg %p323
        $region58: #{ae_unpaired_forward.1} parent=35 // pred_check_branch
          %326 = sbr.rel (%p324) target = $region60
        $region59: #{ae_unpaired_forward.1} parent=35 // pred_region
          %v327 = vld [vmem:[#allocation5] sm:$0xff]
          %vm328 = vcmask 392192
          %329 = vst.msk [vmem:[#allocation2] sm:$0xff] %vm328, %v327
        $region60: #{ae_unpaired_forward.1} parent=35 // pred_fallthru
          _
        %v330 = vld [vmem:[#allocation2] sm:$0xff]
        %v331 = vld [vmem:[%s271] sm:$0xff]
        %v332 = vpack.c.bf16 %v330, %v330
        %v333 = vld [vmem:[%s262] sm:$0xf]
        %v334 = vld [vmem:[%s262 + $0x4] sm:$0xf]
        %v335 = vld [vmem:[%s262 + $0x8] sm:$0xf]
        %v336 = vld [vmem:[%s262 + $0xc] sm:$0xf]
        %v337 = vld [vmem:[%s262 + $0x10] sm:$0xf]
        %v338 = vld [vmem:[%s262 + $0x14] sm:$0xf]
        %v339 = vld [vmem:[%s262 + $0x18] sm:$0xf]
        %v340 = vld [vmem:[%s262 + $0x1c] sm:$0xf]
        %v341 = vld [vmem:[%s262 + $0x20] sm:$0xf]
        %v342 = vld [vmem:[%s262 + $0x24] sm:$0xf]
        %v343 = vld [vmem:[%s262 + $0x28] sm:$0xf]
        %v344 = vld [vmem:[%s262 + $0x2c] sm:$0xf]
        %v345 = vld [vmem:[%s262 + $0x30] sm:$0xf]
        %v346 = vld [vmem:[%s262 + $0x34] sm:$0xf]
        %v347 = vld [vmem:[%s262 + $0x38] sm:$0xf]
        %v348 = vld [vmem:[%s262 + $0x3c] sm:$0xf]
        %v365 = vunpack.c.l.b16 %v333
        %v366 = vunpack.c.l.b16 %v334
        %v367 = vunpack.c.l.b16 %v335
        %v368 = vunpack.c.l.b16 %v336
        %v369 = vunpack.c.l.b16 %v337
        %v370 = vunpack.c.l.b16 %v338
        %v371 = vunpack.c.l.b16 %v339
        %v372 = vunpack.c.l.b16 %v340
        %v373 = vunpack.c.l.b16 %v341
        %v374 = vunpack.c.l.b16 %v342
        %v375 = vunpack.c.l.b16 %v343
        %v376 = vunpack.c.l.b16 %v344
        %v377 = vunpack.c.l.b16 %v345
        %v378 = vunpack.c.l.b16 %v346
        %v379 = vunpack.c.l.b16 %v347
        %v380 = vunpack.c.l.b16 %v348
        %v381 = vpack.c.b16 %v366, %v365
        %v382 = vpack.c.b16 %v368, %v367
        %v383 = vpack.c.b16 %v370, %v369
        %v384 = vpack.c.b16 %v372, %v371
        %v385 = vpack.c.b16 %v374, %v373
        %v386 = vpack.c.b16 %v376, %v375
        %v387 = vpack.c.b16 %v378, %v377
        %v388 = vpack.c.b16 %v380, %v379
        %397 = vmatprep.subr.bf16.mxu0 0
        %398 = vmatpush1.bf16.msra.mxu0 %v388
        %399 = vmatprep.subr.bf16.mxu0 0
        %400 = vmatpush1.bf16.msra.mxu0 %v387
        %401 = vmatprep.subr.bf16.mxu0 0
        %402 = vmatpush1.bf16.msra.mxu0 %v386
        %403 = vmatprep.subr.bf16.mxu0 0
        %404 = vmatpush1.bf16.msra.mxu0 %v385
        %405 = vmatprep.subr.bf16.mxu0 0
        %406 = vmatpush1.bf16.msra.mxu0 %v384
        %407 = vmatprep.subr.bf16.mxu0 0
        %408 = vmatpush1.bf16.msra.mxu0 %v383
        %409 = vmatprep.subr.bf16.mxu0 0
        %410 = vmatpush1.bf16.msra.mxu0 %v382
        %411 = vmatprep.subr.bf16.mxu0 0
        %412 = vmatpush1.bf16.msra.mxu0 %v381
        %413 = vmatprep.subr.bf16.mxu0 0
        %414 = vmatpush2.bf16.msra.mxu0 0
        %415 = vmatprep.subr.bf16.mxu0 0
        %416 = vmatpush2.bf16.msra.mxu0 0
        %417 = vmatprep.subr.bf16.mxu0 0
        %418 = vmatpush2.bf16.msra.mxu0 0
        %419 = vmatprep.subr.bf16.mxu0 0
        %420 = vmatpush2.bf16.msra.mxu0 0
        %421 = vmatprep.subr.bf16.mxu0 0
        %422 = vmatpush2.bf16.msra.mxu0 0
        %423 = vmatprep.subr.bf16.mxu0 0
        %424 = vmatpush2.bf16.msra.mxu0 0
        %425 = vmatprep.subr.bf16.mxu0 0
        %426 = vmatpush2.bf16.msra.mxu0 0
        %427 = vmatprep.subr.bf16.mxu0 0
        %428 = vmatpush2.bf16.msra.mxu0 0
        %429 = vmatprep.mubr.bf16.mxu0 0
        %430 = vmatmul.mubr.bf16.gmra.mxu0 %v332
        %v431 = vpop.f32.mrf.mxu0
        %v432 = vadd.f32 0.0, %v431
        %v433 = vpop.f32.mrf.mxu0
        %v434 = vpop.f32.mrf.mxu0
        %v435 = vpop.f32.mrf.mxu0
        %436 = vdwg.mxu0
        %v437 = vrot.slane %v432, 4
        %v438 = vadd.f32 %v432, %v437
        %v439 = vrot.slane %v438, 2
        %v440 = vadd.f32 %v438, %v439
        %v441 = vrot.slane %v440, 1
        %v442 = vadd.f32 %v440, %v441
        %v443 = vmul.f32 %v432, %v432
        %v444 = vrot.slane %v443, 4
        %v445 = vadd.f32 %v443, %v444
        %v446 = vrot.slane %v445, 2
        %v447 = vadd.f32 %v445, %v446
        %v448 = vrot.slane %v447, 1
        %v449 = vadd.f32 %v447, %v448
        %v450 = vmul.f32 %v442, 0.125
        %v451 = vmul.f32 %v449, 0.125
        %v452 = vmul.f32 %v450, %v450
        %v453 = vsub.f32 %v451, %v452
        %v454 = vadd.f32 %v453, 1e-05
        %v455 = vrsqrt.pop %v454
        %v456 = vmul.f32 %v331, %v455
        %v457 = vmul.f32 %v450, %v456
        %v459 = vrot.slane %v457, 7
        %v461 = vsub.f32 %v331, %v459
        %v462 = vlaneseq
        %v463 = vshrl.u32 %v462, 7
        %v464 = vsub.s32 1, %v463
        %v465 = vrot.slane %v456, %v464
        %v466 = vmul.f32 %v432, %v465
        %v467 = vlaneseq
        %v468 = vshrl.u32 %v467, 7
        %v469 = vsub.s32 2, %v468
        %v470 = vrot.slane %v461, %v469
        %v471 = vadd.f32 %v466, %v470
        %vm472 = vcmp.ge.f32.partialorder %v471, 0.0
        %v473 = vmul.f32 %v471, 0.2
        %v474 = vsel %vm472, %v471, %v473
        %s475 = scalar_lea.vmem %s271, 8 [#allocation8]
        %v476 = vld [vmem:[%s475] sm:$0xff]
        %v477 = vpack.c.bf16 %v474, %v474
        %s478 = scalar_lea.vmem %s262, 64 [#allocation7]
        %v479 = vld [vmem:[%s478] sm:$0xf]
        %v480 = vld [vmem:[%s478 + $0x4] sm:$0xf]
        %v481 = vld [vmem:[%s478 + $0x8] sm:$0xf]
        %v482 = vld [vmem:[%s478 + $0xc] sm:$0xf]
        %v483 = vld [vmem:[%s478 + $0x10] sm:$0xf]
        %v484 = vld [vmem:[%s478 + $0x14] sm:$0xf]
        %v485 = vld [vmem:[%s478 + $0x18] sm:$0xf]
        %v486 = vld [vmem:[%s478 + $0x1c] sm:$0xf]
        %v487 = vld [vmem:[%s478 + $0x20] sm:$0xf]
        %v488 = vld [vmem:[%s478 + $0x24] sm:$0xf]
        %v489 = vld [vmem:[%s478 + $0x28] sm:$0xf]
        %v490 = vld [vmem:[%s478 + $0x2c] sm:$0xf]
        %v491 = vld [vmem:[%s478 + $0x30] sm:$0xf]
        %v492 = vld [vmem:[%s478 + $0x34] sm:$0xf]
        %v493 = vld [vmem:[%s478 + $0x38] sm:$0xf]
        %v494 = vld [vmem:[%s478 + $0x3c] sm:$0xf]
        %v511 = vunpack.c.l.b16 %v479
        %v512 = vunpack.c.l.b16 %v480
        %v513 = vunpack.c.l.b16 %v481
        %v514 = vunpack.c.l.b16 %v482
        %v515 = vunpack.c.l.b16 %v483
        %v516 = vunpack.c.l.b16 %v484
        %v517 = vunpack.c.l.b16 %v485
        %v518 = vunpack.c.l.b16 %v486
        %v519 = vunpack.c.l.b16 %v487
        %v520 = vunpack.c.l.b16 %v488
        %v521 = vunpack.c.l.b16 %v489
        %v522 = vunpack.c.l.b16 %v490
        %v523 = vunpack.c.l.b16 %v491
        %v524 = vunpack.c.l.b16 %v492
        %v525 = vunpack.c.l.b16 %v493
        %v526 = vunpack.c.l.b16 %v494
        %v527 = vpack.c.b16 %v512, %v511
        %v528 = vpack.c.b16 %v514, %v513
        %v529 = vpack.c.b16 %v516, %v515
        %v530 = vpack.c.b16 %v518, %v517
        %v531 = vpack.c.b16 %v520, %v519
        %v532 = vpack.c.b16 %v522, %v521
        %v533 = vpack.c.b16 %v524, %v523
        %v534 = vpack.c.b16 %v526, %v525
        %543 = vmatprep.subr.bf16.mxu0 0
        %544 = vmatpush1.bf16.msra.mxu0 %v534
        %545 = vmatprep.subr.bf16.mxu0 0
        %546 = vmatpush1.bf16.msra.mxu0 %v533
        %547 = vmatprep.subr.bf16.mxu0 0
        %548 = vmatpush1.bf16.msra.mxu0 %v532
        %549 = vmatprep.subr.bf16.mxu0 0
        %550 = vmatpush1.bf16.msra.mxu0 %v531
        %551 = vmatprep.subr.bf16.mxu0 0
        %552 = vmatpush1.bf16.msra.mxu0 %v530
        %553 = vmatprep.subr.bf16.mxu0 0
        %554 = vmatpush1.bf16.msra.mxu0 %v529
        %555 = vmatprep.subr.bf16.mxu0 0
        %556 = vmatpush1.bf16.msra.mxu0 %v528
        %557 = vmatprep.subr.bf16.mxu0 0
        %558 = vmatpush1.bf16.msra.mxu0 %v527
        %559 = vmatprep.subr.bf16.mxu0 0
        %560 = vmatpush2.bf16.msra.mxu0 0
        %561 = vmatprep.subr.bf16.mxu0 0
        %562 = vmatpush2.bf16.msra.mxu0 0
        %563 = vmatprep.subr.bf16.mxu0 0
        %564 = vmatpush2.bf16.msra.mxu0 0
        %565 = vmatprep.subr.bf16.mxu0 0
        %566 = vmatpush2.bf16.msra.mxu0 0
        %567 = vmatprep.subr.bf16.mxu0 0
        %568 = vmatpush2.bf16.msra.mxu0 0
        %569 = vmatprep.subr.bf16.mxu0 0
        %570 = vmatpush2.bf16.msra.mxu0 0
        %571 = vmatprep.subr.bf16.mxu0 0
        %572 = vmatpush2.bf16.msra.mxu0 0
        %573 = vmatprep.subr.bf16.mxu0 0
        %574 = vmatpush2.bf16.msra.mxu0 0
        %575 = vmatprep.mubr.bf16.mxu0 0
        %576 = vmatmul.mubr.bf16.gmra.mxu0 %v477
        %v577 = vpop.f32.mrf.mxu0
        %v578 = vadd.f32 0.0, %v577
        %v579 = vpop.f32.mrf.mxu0
        %v580 = vpop.f32.mrf.mxu0
        %v581 = vpop.f32.mrf.mxu0
        %582 = vdwg.mxu0
        %v583 = vrot.slane %v578, 4
        %v584 = vadd.f32 %v578, %v583
        %v585 = vrot.slane %v584, 2
        %v586 = vadd.f32 %v584, %v585
        %v587 = vrot.slane %v586, 1
        %v588 = vadd.f32 %v586, %v587
        %v589 = vmul.f32 %v578, %v578
        %v590 = vrot.slane %v589, 4
        %v591 = vadd.f32 %v589, %v590
        %v592 = vrot.slane %v591, 2
        %v593 = vadd.f32 %v591, %v592
        %v594 = vrot.slane %v593, 1
        %v595 = vadd.f32 %v593, %v594
        %v596 = vmul.f32 %v588, 0.125
        %v597 = vmul.f32 %v595, 0.125
        %v598 = vmul.f32 %v596, %v596
        %v599 = vsub.f32 %v597, %v598
        %v600 = vadd.f32 %v599, 1e-05
        %v601 = vrsqrt.pop %v600
        %v602 = vmul.f32 %v476, %v601
        %v603 = vmul.f32 %v596, %v602
        %v605 = vrot.slane %v603, 7
        %v607 = vsub.f32 %v476, %v605
        %v608 = vlaneseq
        %v609 = vshrl.u32 %v608, 7
        %v610 = vsub.s32 1, %v609
        %v611 = vrot.slane %v602, %v610
        %v612 = vmul.f32 %v578, %v611
        %v613 = vlaneseq
        %v614 = vshrl.u32 %v613, 7
        %v615 = vsub.s32 2, %v614
        %v616 = vrot.slane %v607, %v615
        %v617 = vadd.f32 %v612, %v616
        %vm618 = vcmp.ge.f32.partialorder %v617, 0.0
        %v619 = vmul.f32 %v617, 0.2
        %v620 = vsel %vm618, %v617, %v619
        %s621 = scalar_lea.vmem %s271, 16 [#allocation8]
        %v622 = vld [vmem:[%s621] sm:$0xff]
        %v623 = vpack.c.bf16 %v620, %v620
        %s624 = scalar_lea.vmem %s262, 128 [#allocation7]
        %v625 = vld [vmem:[%s624] sm:$0xf]
        %v626 = vld [vmem:[%s624 + $0x4] sm:$0xf]
        %v627 = vld [vmem:[%s624 + $0x8] sm:$0xf]
        %v628 = vld [vmem:[%s624 + $0xc] sm:$0xf]
        %v629 = vld [vmem:[%s624 + $0x10] sm:$0xf]
        %v630 = vld [vmem:[%s624 + $0x14] sm:$0xf]
        %v631 = vld [vmem:[%s624 + $0x18] sm:$0xf]
        %v632 = vld [vmem:[%s624 + $0x1c] sm:$0xf]
        %v633 = vld [vmem:[%s624 + $0x20] sm:$0xf]
        %v634 = vld [vmem:[%s624 + $0x24] sm:$0xf]
        %v635 = vld [vmem:[%s624 + $0x28] sm:$0xf]
        %v636 = vld [vmem:[%s624 + $0x2c] sm:$0xf]
        %v637 = vld [vmem:[%s624 + $0x30] sm:$0xf]
        %v638 = vld [vmem:[%s624 + $0x34] sm:$0xf]
        %v639 = vld [vmem:[%s624 + $0x38] sm:$0xf]
        %v640 = vld [vmem:[%s624 + $0x3c] sm:$0xf]
        %v657 = vunpack.c.l.b16 %v625
        %v658 = vunpack.c.l.b16 %v626
        %v659 = vunpack.c.l.b16 %v627
        %v660 = vunpack.c.l.b16 %v628
        %v661 = vunpack.c.l.b16 %v629
        %v662 = vunpack.c.l.b16 %v630
        %v663 = vunpack.c.l.b16 %v631
        %v664 = vunpack.c.l.b16 %v632
        %v665 = vunpack.c.l.b16 %v633
        %v666 = vunpack.c.l.b16 %v634
        %v667 = vunpack.c.l.b16 %v635
        %v668 = vunpack.c.l.b16 %v636
        %v669 = vunpack.c.l.b16 %v637
        %v670 = vunpack.c.l.b16 %v638
        %v671 = vunpack.c.l.b16 %v639
        %v672 = vunpack.c.l.b16 %v640
        %v673 = vpack.c.b16 %v658, %v657
        %v674 = vpack.c.b16 %v660, %v659
        %v675 = vpack.c.b16 %v662, %v661
        %v676 = vpack.c.b16 %v664, %v663
        %v677 = vpack.c.b16 %v666, %v665
        %v678 = vpack.c.b16 %v668, %v667
        %v679 = vpack.c.b16 %v670, %v669
        %v680 = vpack.c.b16 %v672, %v671
        %689 = vmatprep.subr.bf16.mxu0 0
        %690 = vmatpush1.bf16.msra.mxu0 %v680
        %691 = vmatprep.subr.bf16.mxu0 0
        %692 = vmatpush1.bf16.msra.mxu0 %v679
        %693 = vmatprep.subr.bf16.mxu0 0
        %694 = vmatpush1.bf16.msra.mxu0 %v678
        %695 = vmatprep.subr.bf16.mxu0 0
        %696 = vmatpush1.bf16.msra.mxu0 %v677
        %697 = vmatprep.subr.bf16.mxu0 0
        %698 = vmatpush1.bf16.msra.mxu0 %v676
        %699 = vmatprep.subr.bf16.mxu0 0
        %700 = vmatpush1.bf16.msra.mxu0 %v675
        %701 = vmatprep.subr.bf16.mxu0 0
        %702 = vmatpush1.bf16.msra.mxu0 %v674
        %703 = vmatprep.subr.bf16.mxu0 0
        %704 = vmatpush1.bf16.msra.mxu0 %v673
        %705 = vmatprep.subr.bf16.mxu0 0
        %706 = vmatpush2.bf16.msra.mxu0 0
        %707 = vmatprep.subr.bf16.mxu0 0
        %708 = vmatpush2.bf16.msra.mxu0 0
        %709 = vmatprep.subr.bf16.mxu0 0
        %710 = vmatpush2.bf16.msra.mxu0 0
        %711 = vmatprep.subr.bf16.mxu0 0
        %712 = vmatpush2.bf16.msra.mxu0 0
        %713 = vmatprep.subr.bf16.mxu0 0
        %714 = vmatpush2.bf16.msra.mxu0 0
        %715 = vmatprep.subr.bf16.mxu0 0
        %716 = vmatpush2.bf16.msra.mxu0 0
        %717 = vmatprep.subr.bf16.mxu0 0
        %718 = vmatpush2.bf16.msra.mxu0 0
        %719 = vmatprep.subr.bf16.mxu0 0
        %720 = vmatpush2.bf16.msra.mxu0 0
        %721 = vmatprep.mubr.bf16.mxu0 0
        %722 = vmatmul.mubr.bf16.gmra.mxu0 %v623
        %v723 = vpop.f32.mrf.mxu0
        %v724 = vadd.f32 0.0, %v723
        %v725 = vpop.f32.mrf.mxu0
        %v726 = vpop.f32.mrf.mxu0
        %v727 = vpop.f32.mrf.mxu0
        %728 = vdwg.mxu0
        %v729 = vrot.slane %v724, 4
        %v730 = vadd.f32 %v724, %v729
        %v731 = vrot.slane %v730, 2
        %v732 = vadd.f32 %v730, %v731
        %v733 = vrot.slane %v732, 1
        %v734 = vadd.f32 %v732, %v733
        %v735 = vmul.f32 %v724, %v724
        %v736 = vrot.slane %v735, 4
        %v737 = vadd.f32 %v735, %v736
        %v738 = vrot.slane %v737, 2
        %v739 = vadd.f32 %v737, %v738
        %v740 = vrot.slane %v739, 1
        %v741 = vadd.f32 %v739, %v740
        %v742 = vmul.f32 %v734, 0.125
        %v743 = vmul.f32 %v741, 0.125
        %v744 = vmul.f32 %v742, %v742
        %v745 = vsub.f32 %v743, %v744
        %v746 = vadd.f32 %v745, 1e-05
        %v747 = vrsqrt.pop %v746
        %v748 = vmul.f32 %v622, %v747
        %v749 = vmul.f32 %v742, %v748
        %v751 = vrot.slane %v749, 7
        %v753 = vsub.f32 %v622, %v751
        %v754 = vlaneseq
        %v755 = vshrl.u32 %v754, 7
        %v756 = vsub.s32 1, %v755
        %v757 = vrot.slane %v748, %v756
        %v758 = vmul.f32 %v724, %v757
        %v759 = vlaneseq
        %v760 = vshrl.u32 %v759, 7
        %v761 = vsub.s32 2, %v760
        %v762 = vrot.slane %v753, %v761
        %v763 = vadd.f32 %v758, %v762
        %vm764 = vcmp.ge.f32.partialorder %v763, 0.0
        %v765 = vmul.f32 %v763, 0.2
        %v766 = vsel %vm764, %v763, %v765
        %s767 = scalar_lea.vmem %s271, 24 [#allocation8]
        %v768 = vld [vmem:[%s767] sm:$0xff]
        %v769 = vpack.c.bf16 %v766, %v766
        %s770 = scalar_lea.vmem %s262, 192 [#allocation7]
        %v771 = vld [vmem:[%s770] sm:$0xf]
        %v772 = vld [vmem:[%s770 + $0x4] sm:$0xf]
        %v773 = vld [vmem:[%s770 + $0x8] sm:$0xf]
        %v774 = vld [vmem:[%s770 + $0xc] sm:$0xf]
        %v775 = vld [vmem:[%s770 + $0x10] sm:$0xf]
        %v776 = vld [vmem:[%s770 + $0x14] sm:$0xf]
        %v777 = vld [vmem:[%s770 + $0x18] sm:$0xf]
        %v778 = vld [vmem:[%s770 + $0x1c] sm:$0xf]
        %v779 = vld [vmem:[%s770 + $0x20] sm:$0xf]
        %v780 = vld [vmem:[%s770 + $0x24] sm:$0xf]
        %v781 = vld [vmem:[%s770 + $0x28] sm:$0xf]
        %v782 = vld [vmem:[%s770 + $0x2c] sm:$0xf]
        %v783 = vld [vmem:[%s770 + $0x30] sm:$0xf]
        %v784 = vld [vmem:[%s770 + $0x34] sm:$0xf]
        %v785 = vld [vmem:[%s770 + $0x38] sm:$0xf]
        %v786 = vld [vmem:[%s770 + $0x3c] sm:$0xf]
        %v787 = vlaneseq
        %v788 = vshrl.u32 %v787, 7
        %v789 = vsub.s32 0, %v788
        %v790 = vrot.slane %v768, %v789
        %v807 = vunpack.c.l.b16 %v771
        %v808 = vunpack.c.l.b16 %v772
        %v809 = vunpack.c.l.b16 %v773
        %v810 = vunpack.c.l.b16 %v774
        %v811 = vunpack.c.l.b16 %v775
        %v812 = vunpack.c.l.b16 %v776
        %v813 = vunpack.c.l.b16 %v777
        %v814 = vunpack.c.l.b16 %v778
        %v815 = vunpack.c.l.b16 %v779
        %v816 = vunpack.c.l.b16 %v780
        %v817 = vunpack.c.l.b16 %v781
        %v818 = vunpack.c.l.b16 %v782
        %v819 = vunpack.c.l.b16 %v783
        %v820 = vunpack.c.l.b16 %v784
        %v821 = vunpack.c.l.b16 %v785
        %v822 = vunpack.c.l.b16 %v786
        %v823 = vpack.c.b16 %v808, %v807
        %v824 = vpack.c.b16 %v810, %v809
        %v825 = vpack.c.b16 %v812, %v811
        %v826 = vpack.c.b16 %v814, %v813
        %v827 = vpack.c.b16 %v816, %v815
        %v828 = vpack.c.b16 %v818, %v817
        %v829 = vpack.c.b16 %v820, %v819
        %v830 = vpack.c.b16 %v822, %v821
        %839 = vmatprep.subr.bf16.mxu0 0
        %840 = vmatpush1.bf16.msra.mxu0 %v830
        %841 = vmatprep.subr.bf16.mxu0 0
        %842 = vmatpush1.bf16.msra.mxu0 %v829
        %843 = vmatprep.subr.bf16.mxu0 0
        %844 = vmatpush1.bf16.msra.mxu0 %v828
        %845 = vmatprep.subr.bf16.mxu0 0
        %846 = vmatpush1.bf16.msra.mxu0 %v827
        %847 = vmatprep.subr.bf16.mxu0 0
        %848 = vmatpush1.bf16.msra.mxu0 %v826
        %849 = vmatprep.subr.bf16.mxu0 0
        %850 = vmatpush1.bf16.msra.mxu0 %v825
        %851 = vmatprep.subr.bf16.mxu0 0
        %852 = vmatpush1.bf16.msra.mxu0 %v824
        %853 = vmatprep.subr.bf16.mxu0 0
        %854 = vmatpush1.bf16.msra.mxu0 %v823
        %855 = vmatprep.subr.bf16.mxu0 0
        %856 = vmatpush2.bf16.msra.mxu0 0
        %857 = vmatprep.subr.bf16.mxu0 0
        %858 = vmatpush2.bf16.msra.mxu0 0
        %859 = vmatprep.subr.bf16.mxu0 0
        %860 = vmatpush2.bf16.msra.mxu0 0
        %861 = vmatprep.subr.bf16.mxu0 0
        %862 = vmatpush2.bf16.msra.mxu0 0
        %863 = vmatprep.subr.bf16.mxu0 0
        %864 = vmatpush2.bf16.msra.mxu0 0
        %865 = vmatprep.subr.bf16.mxu0 0
        %866 = vmatpush2.bf16.msra.mxu0 0
        %867 = vmatprep.subr.bf16.mxu0 0
        %868 = vmatpush2.bf16.msra.mxu0 0
        %869 = vmatprep.subr.bf16.mxu0 0
        %870 = vmatpush2.bf16.msra.mxu0 0
        %871 = vmatprep.mubr.bf16.mxu0 0
        %872 = vmatmul.mubr.bf16.gmra.mxu0 %v769
        %v873 = vpop.f32.mrf.mxu0
        %v874 = vadd.f32 %v790, %v873
        %v875 = vpop.f32.mrf.mxu0
        %v876 = vpop.f32.mrf.mxu0
        %v877 = vpop.f32.mrf.mxu0
        %878 = vdwg.mxu0
        %879 = vst [vmem:[%s313] sm:$0xff] %v874
        %s880 = scalar_lea.vmem %s271, 32 [#allocation8]
        %v881 = vld [vmem:[%s880] sm:$0xff]
        %v882 = vpack.c.bf16 %v874, %v874
        %s883 = scalar_lea.vmem %s262, 256 [#allocation7]
        %v884 = vld [vmem:[%s883] sm:$0xf]
        %v885 = vld [vmem:[%s883 + $0x4] sm:$0xf]
        %v886 = vld [vmem:[%s883 + $0x8] sm:$0xf]
        %v887 = vld [vmem:[%s883 + $0xc] sm:$0xf]
        %v888 = vld [vmem:[%s883 + $0x10] sm:$0xf]
        %v889 = vld [vmem:[%s883 + $0x14] sm:$0xf]
        %v890 = vld [vmem:[%s883 + $0x18] sm:$0xf]
        %v891 = vld [vmem:[%s883 + $0x1c] sm:$0xf]
        %v892 = vld [vmem:[%s883 + $0x20] sm:$0xf]
        %v893 = vld [vmem:[%s883 + $0x24] sm:$0xf]
        %v894 = vld [vmem:[%s883 + $0x28] sm:$0xf]
        %v895 = vld [vmem:[%s883 + $0x2c] sm:$0xf]
        %v896 = vld [vmem:[%s883 + $0x30] sm:$0xf]
        %v897 = vld [vmem:[%s883 + $0x34] sm:$0xf]
        %v898 = vld [vmem:[%s883 + $0x38] sm:$0xf]
        %v899 = vld [vmem:[%s883 + $0x3c] sm:$0xf]
        %v916 = vunpack.c.l.b16 %v884
        %v917 = vunpack.c.l.b16 %v885
        %v918 = vunpack.c.l.b16 %v886
        %v919 = vunpack.c.l.b16 %v887
        %v920 = vunpack.c.l.b16 %v888
        %v921 = vunpack.c.l.b16 %v889
        %v922 = vunpack.c.l.b16 %v890
        %v923 = vunpack.c.l.b16 %v891
        %v924 = vunpack.c.l.b16 %v892
        %v925 = vunpack.c.l.b16 %v893
        %v926 = vunpack.c.l.b16 %v894
        %v927 = vunpack.c.l.b16 %v895
        %v928 = vunpack.c.l.b16 %v896
        %v929 = vunpack.c.l.b16 %v897
        %v930 = vunpack.c.l.b16 %v898
        %v931 = vunpack.c.l.b16 %v899
        %v932 = vpack.c.b16 %v917, %v916
        %v933 = vpack.c.b16 %v919, %v918
        %v934 = vpack.c.b16 %v921, %v920
        %v935 = vpack.c.b16 %v923, %v922
        %v936 = vpack.c.b16 %v925, %v924
        %v937 = vpack.c.b16 %v927, %v926
        %v938 = vpack.c.b16 %v929, %v928
        %v939 = vpack.c.b16 %v931, %v930
        %948 = vmatprep.subr.bf16.mxu0 0
        %949 = vmatpush1.bf16.msra.mxu0 %v939
        %950 = vmatprep.subr.bf16.mxu0 0
        %951 = vmatpush1.bf16.msra.mxu0 %v938
        %952 = vmatprep.subr.bf16.mxu0 0
        %953 = vmatpush1.bf16.msra.mxu0 %v937
        %954 = vmatprep.subr.bf16.mxu0 0
        %955 = vmatpush1.bf16.msra.mxu0 %v936
        %956 = vmatprep.subr.bf16.mxu0 0
        %957 = vmatpush1.bf16.msra.mxu0 %v935
        %958 = vmatprep.subr.bf16.mxu0 0
        %959 = vmatpush1.bf16.msra.mxu0 %v934
        %960 = vmatprep.subr.bf16.mxu0 0
        %961 = vmatpush1.bf16.msra.mxu0 %v933
        %962 = vmatprep.subr.bf16.mxu0 0
        %963 = vmatpush1.bf16.msra.mxu0 %v932
        %964 = vmatprep.subr.bf16.mxu0 0
        %965 = vmatpush2.bf16.msra.mxu0 0
        %966 = vmatprep.subr.bf16.mxu0 0
        %967 = vmatpush2.bf16.msra.mxu0 0
        %968 = vmatprep.subr.bf16.mxu0 0
        %969 = vmatpush2.bf16.msra.mxu0 0
        %970 = vmatprep.subr.bf16.mxu0 0
        %971 = vmatpush2.bf16.msra.mxu0 0
        %972 = vmatprep.subr.bf16.mxu0 0
        %973 = vmatpush2.bf16.msra.mxu0 0
        %974 = vmatprep.subr.bf16.mxu0 0
        %975 = vmatpush2.bf16.msra.mxu0 0
        %976 = vmatprep.subr.bf16.mxu0 0
        %977 = vmatpush2.bf16.msra.mxu0 0
        %978 = vmatprep.subr.bf16.mxu0 0
        %979 = vmatpush2.bf16.msra.mxu0 0
        %980 = vmatprep.mubr.bf16.mxu0 0
        %981 = vmatmul.mubr.bf16.gmra.mxu0 %v882
        %v982 = vpop.f32.mrf.mxu0
        %v983 = vadd.f32 0.0, %v982
        %v984 = vpop.f32.mrf.mxu0
        %v985 = vpop.f32.mrf.mxu0
        %v986 = vpop.f32.mrf.mxu0
        %987 = vdwg.mxu0
        %v988 = vrot.slane %v983, 4
        %v989 = vadd.f32 %v983, %v988
        %v990 = vrot.slane %v989, 2
        %v991 = vadd.f32 %v989, %v990
        %v992 = vrot.slane %v991, 1
        %v993 = vadd.f32 %v991, %v992
        %v994 = vmul.f32 %v983, %v983
        %v995 = vrot.slane %v994, 4
        %v996 = vadd.f32 %v994, %v995
        %v997 = vrot.slane %v996, 2
        %v998 = vadd.f32 %v996, %v997
        %v999 = vrot.slane %v998, 1
        %v1000 = vadd.f32 %v998, %v999
        %v1001 = vmul.f32 %v993, 0.125
        %v1002 = vmul.f32 %v1000, 0.125
        %v1003 = vmul.f32 %v1001, %v1001
        %v1004 = vsub.f32 %v1002, %v1003
        %v1005 = vadd.f32 %v1004, 1e-05
        %v1006 = vrsqrt.pop %v1005
        %v1007 = vmul.f32 %v881, %v1006
        %v1008 = vmul.f32 %v1001, %v1007
        %v1010 = vrot.slane %v1008, 7
        %v1012 = vsub.f32 %v881, %v1010
        %v1013 = vlaneseq
        %v1014 = vshrl.u32 %v1013, 7
        %v1015 = vsub.s32 1, %v1014
        %v1016 = vrot.slane %v1007, %v1015
        %v1017 = vmul.f32 %v983, %v1016
        %v1018 = vlaneseq
        %v1019 = vshrl.u32 %v1018, 7
        %v1020 = vsub.s32 2, %v1019
        %v1021 = vrot.slane %v1012, %v1020
        %v1022 = vadd.f32 %v1017, %v1021
        %vm1023 = vcmp.ge.f32.partialorder %v1022, 0.0
        %v1024 = vmul.f32 %v1022, 0.2
        %v1025 = vsel %vm1023, %v1022, %v1024
        %s1026 = scalar_lea.vmem %s271, 40 [#allocation8]
        %v1027 = vld [vmem:[%s1026] sm:$0xff]
        %v1028 = vpack.c.bf16 %v1025, %v1025
        %s1029 = scalar_lea.vmem %s262, 320 [#allocation7]
        %v1030 = vld [vmem:[%s1029] sm:$0xf]
        %v1031 = vld [vmem:[%s1029 + $0x4] sm:$0xf]
        %v1032 = vld [vmem:[%s1029 + $0x8] sm:$0xf]
        %v1033 = vld [vmem:[%s1029 + $0xc] sm:$0xf]
        %v1034 = vld [vmem:[%s1029 + $0x10] sm:$0xf]
        %v1035 = vld [vmem:[%s1029 + $0x14] sm:$0xf]
        %v1036 = vld [vmem:[%s1029 + $0x18] sm:$0xf]
        %v1037 = vld [vmem:[%s1029 + $0x1c] sm:$0xf]
        %v1038 = vld [vmem:[%s1029 + $0x20] sm:$0xf]
        %v1039 = vld [vmem:[%s1029 + $0x24] sm:$0xf]
        %v1040 = vld [vmem:[%s1029 + $0x28] sm:$0xf]
        %v1041 = vld [vmem:[%s1029 + $0x2c] sm:$0xf]
        %v1042 = vld [vmem:[%s1029 + $0x30] sm:$0xf]
        %v1043 = vld [vmem:[%s1029 + $0x34] sm:$0xf]
        %v1044 = vld [vmem:[%s1029 + $0x38] sm:$0xf]
        %v1045 = vld [vmem:[%s1029 + $0x3c] sm:$0xf]
        %v1062 = vunpack.c.l.b16 %v1030
        %v1063 = vunpack.c.l.b16 %v1031
        %v1064 = vunpack.c.l.b16 %v1032
        %v1065 = vunpack.c.l.b16 %v1033
        %v1066 = vunpack.c.l.b16 %v1034
        %v1067 = vunpack.c.l.b16 %v1035
        %v1068 = vunpack.c.l.b16 %v1036
        %v1069 = vunpack.c.l.b16 %v1037
        %v1070 = vunpack.c.l.b16 %v1038
        %v1071 = vunpack.c.l.b16 %v1039
        %v1072 = vunpack.c.l.b16 %v1040
        %v1073 = vunpack.c.l.b16 %v1041
        %v1074 = vunpack.c.l.b16 %v1042
        %v1075 = vunpack.c.l.b16 %v1043
        %v1076 = vunpack.c.l.b16 %v1044
        %v1077 = vunpack.c.l.b16 %v1045
        %v1078 = vpack.c.b16 %v1063, %v1062
        %v1079 = vpack.c.b16 %v1065, %v1064
        %v1080 = vpack.c.b16 %v1067, %v1066
        %v1081 = vpack.c.b16 %v1069, %v1068
        %v1082 = vpack.c.b16 %v1071, %v1070
        %v1083 = vpack.c.b16 %v1073, %v1072
        %v1084 = vpack.c.b16 %v1075, %v1074
        %v1085 = vpack.c.b16 %v1077, %v1076
        %1094 = vmatprep.subr.bf16.mxu0 0
        %1095 = vmatpush1.bf16.msra.mxu0 %v1085
        %1096 = vmatprep.subr.bf16.mxu0 0
        %1097 = vmatpush1.bf16.msra.mxu0 %v1084
        %1098 = vmatprep.subr.bf16.mxu0 0
        %1099 = vmatpush1.bf16.msra.mxu0 %v1083
        %1100 = vmatprep.subr.bf16.mxu0 0
        %1101 = vmatpush1.bf16.msra.mxu0 %v1082
        %1102 = vmatprep.subr.bf16.mxu0 0
        %1103 = vmatpush1.bf16.msra.mxu0 %v1081
        %1104 = vmatprep.subr.bf16.mxu0 0
        %1105 = vmatpush1.bf16.msra.mxu0 %v1080
        %1106 = vmatprep.subr.bf16.mxu0 0
        %1107 = vmatpush1.bf16.msra.mxu0 %v1079
        %1108 = vmatprep.subr.bf16.mxu0 0
        %1109 = vmatpush1.bf16.msra.mxu0 %v1078
        %1110 = vmatprep.subr.bf16.mxu0 0
        %1111 = vmatpush2.bf16.msra.mxu0 0
        %1112 = vmatprep.subr.bf16.mxu0 0
        %1113 = vmatpush2.bf16.msra.mxu0 0
        %1114 = vmatprep.subr.bf16.mxu0 0
        %1115 = vmatpush2.bf16.msra.mxu0 0
        %1116 = vmatprep.subr.bf16.mxu0 0
        %1117 = vmatpush2.bf16.msra.mxu0 0
        %1118 = vmatprep.subr.bf16.mxu0 0
        %1119 = vmatpush2.bf16.msra.mxu0 0
        %1120 = vmatprep.subr.bf16.mxu0 0
        %1121 = vmatpush2.bf16.msra.mxu0 0
        %1122 = vmatprep.subr.bf16.mxu0 0
        %1123 = vmatpush2.bf16.msra.mxu0 0
        %1124 = vmatprep.subr.bf16.mxu0 0
        %1125 = vmatpush2.bf16.msra.mxu0 0
        %1126 = vmatprep.mubr.bf16.mxu0 0
        %1127 = vmatmul.mubr.bf16.gmra.mxu0 %v1028
        %v1128 = vpop.f32.mrf.mxu0
        %v1129 = vadd.f32 0.0, %v1128
        %v1130 = vpop.f32.mrf.mxu0
        %v1131 = vpop.f32.mrf.mxu0
        %v1132 = vpop.f32.mrf.mxu0
        %1133 = vdwg.mxu0
        %v1134 = vrot.slane %v1129, 4
        %v1135 = vadd.f32 %v1129, %v1134
        %v1136 = vrot.slane %v1135, 2
        %v1137 = vadd.f32 %v1135, %v1136
        %v1138 = vrot.slane %v1137, 1
        %v1139 = vadd.f32 %v1137, %v1138
        %v1140 = vmul.f32 %v1129, %v1129
        %v1141 = vrot.slane %v1140, 4
        %v1142 = vadd.f32 %v1140, %v1141
        %v1143 = vrot.slane %v1142, 2
        %v1144 = vadd.f32 %v1142, %v1143
        %v1145 = vrot.slane %v1144, 1
        %v1146 = vadd.f32 %v1144, %v1145
        %v1147 = vmul.f32 %v1139, 0.125
        %v1148 = vmul.f32 %v1146, 0.125
        %v1149 = vmul.f32 %v1147, %v1147
        %v1150 = vsub.f32 %v1148, %v1149
        %v1151 = vadd.f32 %v1150, 1e-05
        %v1152 = vrsqrt.pop %v1151
        %v1153 = vmul.f32 %v1027, %v1152
        %v1154 = vmul.f32 %v1147, %v1153
        %v1156 = vrot.slane %v1154, 7
        %v1158 = vsub.f32 %v1027, %v1156
        %v1159 = vlaneseq
        %v1160 = vshrl.u32 %v1159, 7
        %v1161 = vsub.s32 1, %v1160
        %v1162 = vrot.slane %v1153, %v1161
        %v1163 = vmul.f32 %v1129, %v1162
        %v1164 = vlaneseq
        %v1165 = vshrl.u32 %v1164, 7
        %v1166 = vsub.s32 2, %v1165
        %v1167 = vrot.slane %v1158, %v1166
        %v1168 = vadd.f32 %v1163, %v1167
        %vm1169 = vcmp.ge.f32.partialorder %v1168, 0.0
        %v1170 = vmul.f32 %v1168, 0.2
        %v1171 = vsel %vm1169, %v1168, %v1170
        %s1172 = scalar_lea.vmem %s271, 48 [#allocation8]
        %v1173 = vld [vmem:[%s1172] sm:$0xff]
        %v1174 = vpack.c.bf16 %v1171, %v1171
        %s1175 = scalar_lea.vmem %s262, 384 [#allocation7]
        %v1176 = vld [vmem:[%s1175] sm:$0xf]
        %v1177 = vld [vmem:[%s1175 + $0x4] sm:$0xf]
        %v1178 = vld [vmem:[%s1175 + $0x8] sm:$0xf]
        %v1179 = vld [vmem:[%s1175 + $0xc] sm:$0xf]
        %v1180 = vld [vmem:[%s1175 + $0x10] sm:$0xf]
        %v1181 = vld [vmem:[%s1175 + $0x14] sm:$0xf]
        %v1182 = vld [vmem:[%s1175 + $0x18] sm:$0xf]
        %v1183 = vld [vmem:[%s1175 + $0x1c] sm:$0xf]
        %v1184 = vld [vmem:[%s1175 + $0x20] sm:$0xf]
        %v1185 = vld [vmem:[%s1175 + $0x24] sm:$0xf]
        %v1186 = vld [vmem:[%s1175 + $0x28] sm:$0xf]
        %v1187 = vld [vmem:[%s1175 + $0x2c] sm:$0xf]
        %v1188 = vld [vmem:[%s1175 + $0x30] sm:$0xf]
        %v1189 = vld [vmem:[%s1175 + $0x34] sm:$0xf]
        %v1190 = vld [vmem:[%s1175 + $0x38] sm:$0xf]
        %v1191 = vld [vmem:[%s1175 + $0x3c] sm:$0xf]
        %v1208 = vunpack.c.l.b16 %v1176
        %v1209 = vunpack.c.l.b16 %v1177
        %v1210 = vunpack.c.l.b16 %v1178
        %v1211 = vunpack.c.l.b16 %v1179
        %v1212 = vunpack.c.l.b16 %v1180
        %v1213 = vunpack.c.l.b16 %v1181
        %v1214 = vunpack.c.l.b16 %v1182
        %v1215 = vunpack.c.l.b16 %v1183
        %v1216 = vunpack.c.l.b16 %v1184
        %v1217 = vunpack.c.l.b16 %v1185
        %v1218 = vunpack.c.l.b16 %v1186
        %v1219 = vunpack.c.l.b16 %v1187
        %v1220 = vunpack.c.l.b16 %v1188
        %v1221 = vunpack.c.l.b16 %v1189
        %v1222 = vunpack.c.l.b16 %v1190
        %v1223 = vunpack.c.l.b16 %v1191
        %v1224 = vpack.c.b16 %v1209, %v1208
        %v1225 = vpack.c.b16 %v1211, %v1210
        %v1226 = vpack.c.b16 %v1213, %v1212
        %v1227 = vpack.c.b16 %v1215, %v1214
        %v1228 = vpack.c.b16 %v1217, %v1216
        %v1229 = vpack.c.b16 %v1219, %v1218
        %v1230 = vpack.c.b16 %v1221, %v1220
        %v1231 = vpack.c.b16 %v1223, %v1222
        %1240 = vmatprep.subr.bf16.mxu0 0
        %1241 = vmatpush1.bf16.msra.mxu0 %v1231
        %1242 = vmatprep.subr.bf16.mxu0 0
        %1243 = vmatpush1.bf16.msra.mxu0 %v1230
        %1244 = vmatprep.subr.bf16.mxu0 0
        %1245 = vmatpush1.bf16.msra.mxu0 %v1229
        %1246 = vmatprep.subr.bf16.mxu0 0
        %1247 = vmatpush1.bf16.msra.mxu0 %v1228
        %1248 = vmatprep.subr.bf16.mxu0 0
        %1249 = vmatpush1.bf16.msra.mxu0 %v1227
        %1250 = vmatprep.subr.bf16.mxu0 0
        %1251 = vmatpush1.bf16.msra.mxu0 %v1226
        %1252 = vmatprep.subr.bf16.mxu0 0
        %1253 = vmatpush1.bf16.msra.mxu0 %v1225
        %1254 = vmatprep.subr.bf16.mxu0 0
        %1255 = vmatpush1.bf16.msra.mxu0 %v1224
        %1256 = vmatprep.subr.bf16.mxu0 0
        %1257 = vmatpush2.bf16.msra.mxu0 0
        %1258 = vmatprep.subr.bf16.mxu0 0
        %1259 = vmatpush2.bf16.msra.mxu0 0
        %1260 = vmatprep.subr.bf16.mxu0 0
        %1261 = vmatpush2.bf16.msra.mxu0 0
        %1262 = vmatprep.subr.bf16.mxu0 0
        %1263 = vmatpush2.bf16.msra.mxu0 0
        %1264 = vmatprep.subr.bf16.mxu0 0
        %1265 = vmatpush2.bf16.msra.mxu0 0
        %1266 = vmatprep.subr.bf16.mxu0 0
        %1267 = vmatpush2.bf16.msra.mxu0 0
        %1268 = vmatprep.subr.bf16.mxu0 0
        %1269 = vmatpush2.bf16.msra.mxu0 0
        %1270 = vmatprep.subr.bf16.mxu0 0
        %1271 = vmatpush2.bf16.msra.mxu0 0
        %1272 = vmatprep.mubr.bf16.mxu0 0
        %1273 = vmatmul.mubr.bf16.gmra.mxu0 %v1174
        %v1274 = vpop.f32.mrf.mxu0
        %v1275 = vadd.f32 0.0, %v1274
        %v1276 = vpop.f32.mrf.mxu0
        %v1277 = vpop.f32.mrf.mxu0
        %v1278 = vpop.f32.mrf.mxu0
        %1279 = vdwg.mxu0
        %v1280 = vrot.slane %v1275, 4
        %v1281 = vadd.f32 %v1275, %v1280
        %v1282 = vrot.slane %v1281, 2
        %v1283 = vadd.f32 %v1281, %v1282
        %v1284 = vrot.slane %v1283, 1
        %v1285 = vadd.f32 %v1283, %v1284
        %v1286 = vmul.f32 %v1275, %v1275
        %v1287 = vrot.slane %v1286, 4
        %v1288 = vadd.f32 %v1286, %v1287
        %v1289 = vrot.slane %v1288, 2
        %v1290 = vadd.f32 %v1288, %v1289
        %v1291 = vrot.slane %v1290, 1
        %v1292 = vadd.f32 %v1290, %v1291
        %v1293 = vmul.f32 %v1285, 0.125
        %v1294 = vmul.f32 %v1292, 0.125
        %v1295 = vmul.f32 %v1293, %v1293
        %v1296 = vsub.f32 %v1294, %v1295
        %v1297 = vadd.f32 %v1296, 1e-05
        %v1298 = vrsqrt.pop %v1297
        %v1299 = vmul.f32 %v1173, %v1298
        %v1300 = vmul.f32 %v1293, %v1299
        %v1302 = vrot.slane %v1300, 7
        %v1304 = vsub.f32 %v1173, %v1302
        %v1305 = vlaneseq
        %v1306 = vshrl.u32 %v1305, 7
        %v1307 = vsub.s32 1, %v1306
        %v1308 = vrot.slane %v1299, %v1307
        %v1309 = vmul.f32 %v1275, %v1308
        %v1310 = vlaneseq
        %v1311 = vshrl.u32 %v1310, 7
        %v1312 = vsub.s32 2, %v1311
        %v1313 = vrot.slane %v1304, %v1312
        %v1314 = vadd.f32 %v1309, %v1313
        %vm1315 = vcmp.ge.f32.partialorder %v1314, 0.0
        %v1316 = vmul.f32 %v1314, 0.2
        %v1317 = vsel %vm1315, %v1314, %v1316
        %s1318 = scalar_lea.vmem %s271, 56 [#allocation8]
        %v1319 = vld [vmem:[%s1318] sm:$0xff]
        %v1320 = vpack.c.bf16 %v1317, %v1317
        %s1321 = scalar_lea.vmem %s262, 448 [#allocation7]
        %v1322 = vld [vmem:[%s1321] sm:$0xf]
        %v1323 = vld [vmem:[%s1321 + $0x4] sm:$0xf]
        %v1324 = vld [vmem:[%s1321 + $0x8] sm:$0xf]
        %v1325 = vld [vmem:[%s1321 + $0xc] sm:$0xf]
        %v1326 = vld [vmem:[%s1321 + $0x10] sm:$0xf]
        %v1327 = vld [vmem:[%s1321 + $0x14] sm:$0xf]
        %v1328 = vld [vmem:[%s1321 + $0x18] sm:$0xf]
        %v1329 = vld [vmem:[%s1321 + $0x1c] sm:$0xf]
        %v1330 = vld [vmem:[%s1321 + $0x20] sm:$0xf]
        %v1331 = vld [vmem:[%s1321 + $0x24] sm:$0xf]
        %v1332 = vld [vmem:[%s1321 + $0x28] sm:$0xf]
        %v1333 = vld [vmem:[%s1321 + $0x2c] sm:$0xf]
        %v1334 = vld [vmem:[%s1321 + $0x30] sm:$0xf]
        %v1335 = vld [vmem:[%s1321 + $0x34] sm:$0xf]
        %v1336 = vld [vmem:[%s1321 + $0x38] sm:$0xf]
        %v1337 = vld [vmem:[%s1321 + $0x3c] sm:$0xf]
        %v1338 = vlaneseq
        %v1339 = vshrl.u32 %v1338, 7
        %v1340 = vsub.s32 0, %v1339
        %v1341 = vrot.slane %v1319, %v1340
        %v1358 = vunpack.c.l.b16 %v1322
        %v1359 = vunpack.c.l.b16 %v1323
        %v1360 = vunpack.c.l.b16 %v1324
        %v1361 = vunpack.c.l.b16 %v1325
        %v1362 = vunpack.c.l.b16 %v1326
        %v1363 = vunpack.c.l.b16 %v1327
        %v1364 = vunpack.c.l.b16 %v1328
        %v1365 = vunpack.c.l.b16 %v1329
        %v1366 = vunpack.c.l.b16 %v1330
        %v1367 = vunpack.c.l.b16 %v1331
        %v1368 = vunpack.c.l.b16 %v1332
        %v1369 = vunpack.c.l.b16 %v1333
        %v1370 = vunpack.c.l.b16 %v1334
        %v1371 = vunpack.c.l.b16 %v1335
        %v1372 = vunpack.c.l.b16 %v1336
        %v1373 = vunpack.c.l.b16 %v1337
        %v1374 = vpack.c.b16 %v1359, %v1358
        %v1375 = vpack.c.b16 %v1361, %v1360
        %v1376 = vpack.c.b16 %v1363, %v1362
        %v1377 = vpack.c.b16 %v1365, %v1364
        %v1378 = vpack.c.b16 %v1367, %v1366
        %v1379 = vpack.c.b16 %v1369, %v1368
        %v1380 = vpack.c.b16 %v1371, %v1370
        %v1381 = vpack.c.b16 %v1373, %v1372
        %1390 = vmatprep.subr.bf16.mxu0 0
        %1391 = vmatpush1.bf16.msra.mxu0 %v1381
        %1392 = vmatprep.subr.bf16.mxu0 0
        %1393 = vmatpush1.bf16.msra.mxu0 %v1380
        %1394 = vmatprep.subr.bf16.mxu0 0
        %1395 = vmatpush1.bf16.msra.mxu0 %v1379
        %1396 = vmatprep.subr.bf16.mxu0 0
        %1397 = vmatpush1.bf16.msra.mxu0 %v1378
        %1398 = vmatprep.subr.bf16.mxu0 0
        %1399 = vmatpush1.bf16.msra.mxu0 %v1377
        %1400 = vmatprep.subr.bf16.mxu0 0
        %1401 = vmatpush1.bf16.msra.mxu0 %v1376
        %1402 = vmatprep.subr.bf16.mxu0 0
        %1403 = vmatpush1.bf16.msra.mxu0 %v1375
        %1404 = vmatprep.subr.bf16.mxu0 0
        %1405 = vmatpush1.bf16.msra.mxu0 %v1374
        %1406 = vmatprep.subr.bf16.mxu0 0
        %1407 = vmatpush2.bf16.msra.mxu0 0
        %1408 = vmatprep.subr.bf16.mxu0 0
        %1409 = vmatpush2.bf16.msra.mxu0 0
        %1410 = vmatprep.subr.bf16.mxu0 0
        %1411 = vmatpush2.bf16.msra.mxu0 0
        %1412 = vmatprep.subr.bf16.mxu0 0
        %1413 = vmatpush2.bf16.msra.mxu0 0
        %1414 = vmatprep.subr.bf16.mxu0 0
        %1415 = vmatpush2.bf16.msra.mxu0 0
        %1416 = vmatprep.subr.bf16.mxu0 0
        %1417 = vmatpush2.bf16.msra.mxu0 0
        %1418 = vmatprep.subr.bf16.mxu0 0
        %1419 = vmatpush2.bf16.msra.mxu0 0
        %1420 = vmatprep.subr.bf16.mxu0 0
        %1421 = vmatpush2.bf16.msra.mxu0 0
        %1422 = vmatprep.mubr.bf16.mxu0 0
        %1423 = vmatmul.mubr.bf16.gmra.mxu0 %v1320
        %v1424 = vpop.f32.mrf.mxu0
        %v1425 = vadd.f32 %v1341, %v1424
        %v1426 = vpop.f32.mrf.mxu0
        %v1427 = vpop.f32.mrf.mxu0
        %v1428 = vpop.f32.mrf.mxu0
        %1429 = vdwg.mxu0
        %1430 = vst [vmem:[%s309] sm:$0xff] %v1425
        %p1431 = scmp.lt.s32.totalorder %s19, 1
        %s1432 = scalar_select %p1431, %s19, 1
        %s1433 = smul.addr %s1432, 8
        %s1434 = scalar_lea.vmem %s4, %s1433
        %p1435 = scmp.lt.s32.totalorder %s19, 1
        %s1436 = scalar_select %p1435, %s19, 1
        %s1437 = smul.addr %s1436, 8
        %s1438 = scalar_lea.vmem %s5, %s1437
        // Predicated region
        $region61: #{ae_unpaired_forward.1} parent=35 // pred_check
          %p1439 = pneg %p131
        $region62: #{ae_unpaired_forward.1} parent=35 // pred_check_branch
          %1441 = sbr.rel (%p1439) target = $region64
        $region63: #{ae_unpaired_forward.1} parent=35 // pred_region
          _
        $region64: #{ae_unpaired_forward.1} parent=35 // pred_fallthru
          _
        // Predicated region
        $region65: #{ae_unpaired_forward.1} parent=35 // pred_check
          %p1442 = pneg %p157
        $region66: #{ae_unpaired_forward.1} parent=35 // pred_check_branch
          %1444 = sbr.rel (%p1442) target = $region68
        $region67: #{ae_unpaired_forward.1} parent=35 // pred_region
          _
        $region68: #{ae_unpaired_forward.1} parent=35 // pred_fallthru
          _
      $region36: #{ae_unpaired_forward.1} parent=5 // pred_fallthru
        _
      %p1445 = scmp.le.s32.totalorder 2, %s14
      // Predicated region
      $region69: #{ae_unpaired_forward.1} parent=5 // pred_check
        %p1446 = pneg %p1445
      $region70: #{ae_unpaired_forward.1} parent=5 // pred_check_branch
        %1448 = sbr.rel (%p1446) target = $region72
      $region71: #{ae_unpaired_forward.1} parent=5 // pred_region
        %s1449 = ssub.s32 %s14, 2
        // Predicated region
        $region73: #{ae_unpaired_forward.1} parent=71 // pred_check
          %p1450 = pneg %p137
        $region74: #{ae_unpaired_forward.1} parent=71 // pred_check_branch
          %1452 = sbr.rel (%p1450) target = $region76
        $region75: #{ae_unpaired_forward.1} parent=71 // pred_region
          %p1453 = scmp.lt.s32.totalorder %s20, 1
          %s1454 = scalar_select %p1453, %s20, 1
          %s1455 = smul.addr %s1454, 8
          %s1456 = scalar_lea.vmem %s4, %s1455
        $region76: #{ae_unpaired_forward.1} parent=71 // pred_fallthru
          _
        // Predicated region
        $region77: #{ae_unpaired_forward.1} parent=71 // pred_check
          %p1457 = pneg %p163
        $region78: #{ae_unpaired_forward.1} parent=71 // pred_check_branch
          %1459 = sbr.rel (%p1457) target = $region80
        $region79: #{ae_unpaired_forward.1} parent=71 // pred_region
          %p1460 = scmp.lt.s32.totalorder %s20, 1
          %s1461 = scalar_select %p1460, %s20, 1
          %s1462 = smul.addr %s1461, 8
          %s1463 = scalar_lea.vmem %s5, %s1462
        $region80: #{ae_unpaired_forward.1} parent=71 // pred_fallthru
          _
      $region72: #{ae_unpaired_forward.1} parent=5 // pred_fallthru
        _
    $region6: #{ae_unpaired_forward.1} parent=1 // loop_footer
      %s18 = sadd.s32 1, %s14
    $region7: #{ae_unpaired_forward.1} parent=1 // loop_footer_branch
      %13 = sbr.rel target = $region3
    $region8: #{ae_unpaired_forward.1} parent=1 // loop_exit
      _
    %1464 = vsyncpa [#allocation4], 1
    %s1465 = scalar_lea.sflag [#allocation4], 1
    %1466 = vsyncpa %s1465, 1
    %1467 = vsyncpa [#allocation6], 1

</llo_original>
